<compile_context>
chip_gen: v5e
topology: v5e:2x2
jax: 0.10.0
libtpu: 0.0.40
codegen_flags: <defaults>
</compile_context>

<pallas_src>
import functools

import jax
import jax.numpy as jnp
from jax.experimental import pallas as pl
from jax.experimental.pallas import tpu as pltpu


def _temporal_conv_kernel(x_ref, w_ref, b_ref, o_ref, *,
                          Vp, K, block_t, f32_highest):
    # x_ref: (1, (T + 2*pad)*Vp, C_in)  padded sample, resident across the j axis
    # w_ref: (K, C_in, C_outp)          taps stacked along the leading axis
    # b_ref: (1, C_outp)                f32 bias
    # o_ref: (1, block_t*Vp, C_outp)
    j = pl.program_id(1)                # temporal tile index
    rows = block_t * Vp
    base = j * block_t * Vp             # multiple of Vp (and hence of 8)
    prec = jax.lax.Precision.HIGHEST if f32_highest else None

    acc = None
    for dt in range(K):                 # K is a static Python int (3 or 9)
        start = pl.multiple_of(base + dt * Vp, 8)     # Vp % 8 == 0 -> aligned
        xs = x_ref[0, pl.ds(start, rows), :]          # (rows, C_in), no copy/pad
        part = jnp.dot(xs, w_ref[dt],                 # (C_in, C_outp) tap slab
                       preferred_element_type=jnp.float32, precision=prec)
        acc = part if acc is None else acc + part     # accumulating vmatmuls

    acc = acc + b_ref[...].astype(jnp.float32)        # bias broadcast over rows
    o_ref[0] = jnp.maximum(acc, 0.0).astype(o_ref.dtype)   # relu + store


def _pick_block_t(T, Vp, compute_itemsize, vmem_limit_bytes):
    """Largest divisor of T whose flattened row count keeps the f32 matmul
    result + double-buffered output tile well inside the scoped VMEM limit."""
    max_rows = 4096 if compute_itemsize <= 2 else 2048
    if vmem_limit_bytes < (48 << 20):          # v7x-class budget
        max_rows //= 2
    cands = [d for d in range(1, T + 1) if T % d == 0 and d * Vp <= max_rows]
    return max(cands) if cands else 1


def temporal_conv(x, w, b, *, kernel_size=3, block_t=None, compute_dtype=None,
                  pad_out_lanes=None):
    """x: (N, T, V, C_in), w: (K, C_in, C_out), b: (C_out,) -> (N, T, V, C_out)."""
    N, T, V, C_in = x.shape
    K, _, C_out = w.shape
    assert K == kernel_size
    pad = K // 2
    out_dtype = x.dtype
    if compute_dtype is None:
        # TODO(synk): default to bfloat16 on v6e/v7x once callers accept the tolerance.
        compute_dtype = x.dtype
    compute_itemsize = jnp.dtype(compute_dtype).itemsize

    # ---- Generation-aware VMEM budget -------------------------------------
    try:
        phys_vmem = int(getattr(pltpu.get_tpu_info(), "vmem_capacity_bytes",
                                64 << 20))
    except Exception:
        phys_vmem = 64 << 20
    vmem_limit = int(max(min(phys_vmem - (16 << 20), 96 << 20), 16 << 20))

    # ---- Layout: pad V to a sublane multiple, fold in the temporal halo ----
    Vp = ((V + 7) // 8) * 8
    Tp = T + 2 * pad

    if block_t is None:
        block_t = _pick_block_t(T, Vp, compute_itemsize, vmem_limit)
    if T % block_t != 0:
        raise ValueError("block_t must divide T")
    n_t = T // block_t
    rows = block_t * Vp

    # Lane policy for the output channels: pad to 128 only when it is both
    # large and misaligned; small C_out layers write their exact width.
    LANES = 128
    if pad_out_lanes is None:
        pad_out_lanes = (C_out > LANES) and (C_out % LANES != 0)
    C_outp = ((C_out + LANES - 1) // LANES) * LANES if pad_out_lanes else C_out

    # Single wrapper pad pass: zero temporal halo + V -> Vp; then flatten (t,v).
    x_p = jnp.pad(x, ((0, 0), (pad, pad), (0, Vp - V), (0, 0)))
    x_flat = x_p.reshape(N, Tp * Vp, C_in)
    if x_flat.dtype != jnp.dtype(compute_dtype):
        x_flat = x_flat.astype(compute_dtype)          # cast once, not per step

    w3 = w.astype(compute_dtype)                        # (K, C_in, C_out)
    b2 = b.reshape(1, C_out).astype(jnp.float32)
    if C_outp != C_out:
        w3 = jnp.pad(w3, ((0, 0), (0, 0), (0, C_outp - C_out)))
        b2 = jnp.pad(b2, ((0, 0), (0, C_outp - C_out)))

    kernel = functools.partial(
        _temporal_conv_kernel, Vp=Vp, K=K, block_t=block_t,
        f32_highest=(jnp.dtype(compute_dtype) == jnp.float32))

    cost = pl.CostEstimate(
        flops=2 * N * T * Vp * K * C_in * C_outp,
        transcendentals=0,
        bytes_accessed=(x_flat.size * x_flat.dtype.itemsize
                        + w3.size * w3.dtype.itemsize
                        + b2.size * 4
                        + N * T * Vp * C_outp * jnp.dtype(out_dtype).itemsize),
    )

    out = pl.pallas_call(
        kernel,
        out_shape=jax.ShapeDtypeStruct((N, T * Vp, C_outp), out_dtype),
        grid_spec=pltpu.PrefetchScalarGridSpec(
            num_scalar_prefetch=0,
            grid=(N, n_t),
            in_specs=[
                # Full padded sample, resident across the T-tile axis (fetched
                # once per sample; index_map ignores j).
                pl.BlockSpec((1, Tp * Vp, C_in), lambda n, j: (n, 0, 0)),
                pl.BlockSpec((K, C_in, C_outp), lambda n, j: (0, 0, 0)),
                pl.BlockSpec((1, C_outp), lambda n, j: (0, 0)),
            ],
            out_specs=pl.BlockSpec((1, rows, C_outp), lambda n, j: (n, j, 0)),
        ),
        compiler_params=pltpu.CompilerParams(
            dimension_semantics=("parallel", "arbitrary"),
            vmem_limit_bytes=vmem_limit,
        ),
        cost_estimate=cost,
    )(x_flat, w3, b2)

    out = out.reshape(N, T, Vp, C_outp)
    if Vp != V:
        out = out[:, :, :V, :]
    if C_outp != C_out:
        out = out[..., :C_out]
    return out


def temporal_conv_reference(x, w, b):
    """Pure-JAX reference matching PyTorch Conv2d((k,1), pad=(k//2,0)) + relu."""
    N, T, V, C_in = x.shape
    K, _, C_out = w.shape
    pad = K // 2
    x_pad = jnp.pad(x.astype(jnp.float32), ((0, 0), (pad, pad), (0, 0), (0, 0)))
    out = jnp.zeros((N, T, V, C_out), jnp.float32)
    for dt in range(K):
        out = out + jnp.einsum("ntvc,cd->ntvd", x_pad[:, dt:dt + T],
                               w[dt].astype(jnp.float32),
                               precision=jax.lax.Precision.HIGHEST)
    out = out + b.astype(jnp.float32)
    return jnp.maximum(out, 0.0)


if __name__ == "__main__":
    # Small shapes consistent with the module's forward:
    # x: (N, T, V, C_in) = (2, 16, 16, 4), out_channels = 8, kernel_size = 3.
    N, T, V, C_in, C_out, K = 2, 16, 16, 4, 8, 3

    key = jax.random.PRNGKey(0)
    kx, kw, kb = jax.random.split(key, 3)
    x = jax.random.normal(kx, (N, T, V, C_in), dtype=jnp.float32)

    # PyTorch Conv2d weight is (C_out, C_in, K, 1); stored here as (K, C_in, C_out).
    fan_in = C_in * K
    bound = 1.0 / (fan_in ** 0.5)
    w = jax.random.uniform(kw, (K, C_in, C_out), minval=-bound, maxval=bound,
                           dtype=jnp.float32)
    b = jax.random.uniform(kb, (C_out,), minval=-bound, maxval=bound,
                           dtype=jnp.float32)

    ref = temporal_conv_reference(x, w, b)

    # f32 path (Precision.HIGHEST matmuls); block_t=8 -> grid (N, T//block_t) = (2, 2).
    out = temporal_conv(x, w, b, kernel_size=K, block_t=8)
    out = jax.block_until_ready(out)
    assert out.shape == (N, T, V, C_out)
    assert jnp.allclose(out, ref, atol=1e-4, rtol=1e-4)

    # bf16-MXU path (v6e / v7x fast path): bf16 operands, f32 accumulation.
    out_bf16 = temporal_conv(x.astype(jnp.bfloat16), w, b, kernel_size=K,
                             block_t=8, compute_dtype=jnp.bfloat16)
    out_bf16 = jax.block_until_ready(out_bf16)
    assert jnp.allclose(out_bf16.astype(jnp.float32), ref, atol=7.5e-2, rtol=7.5e-2)

    print("KERNEL_OK")
</pallas_src>

<mosaic_0001>
module attributes {stable_mosaic.version = 11 : i64} {
  func.func @_temporal_conv_kernel(%arg0: i32, %arg1: i32, %arg2: memref<1x288x4xf32, #tpu.memory_space<vmem>>, %arg3: memref<3x4x8xf32, #tpu.memory_space<vmem>>, %arg4: memref<1x8xf32, #tpu.memory_space<vmem>>, %arg5: memref<1x128x8xf32, #tpu.memory_space<vmem>>) attributes {dimension_semantics = [#tpu.dimension_semantics<parallel>, #tpu.dimension_semantics<arbitrary>], iteration_bounds = array<i64: 2, 2>, scalar_prefetch = 0 : i64, scratch_operands = 0 : i64, tpu.core_type = #tpu.core_type<tc>, window_params = [{transform_indices = @transform_0, window_bounds = array<i64: 1, 288, 4>}, {pipeline_mode = #tpu.pipeline_mode<synchronous>, transform_indices = @transform_1, window_bounds = array<i64: 3, 4, 8>}, {pipeline_mode = #tpu.pipeline_mode<synchronous>, transform_indices = @transform_2, window_bounds = array<i64: 1, 8>}, {transform_indices = @transform_3, window_bounds = array<i64: 1, 128, 8>}]} {
    %c8_i32 = arith.constant 8 : i32
    %0 = arith.muli %arg1, %c8_i32 : i32
    %c16_i32 = arith.constant 16 : i32
    %1 = arith.muli %0, %c16_i32 : i32
    %c0_i32 = arith.constant 0 : i32
    %2 = arith.addi %1, %c0_i32 : i32
    %3 = tpu.assume_multiple %2, 8 : i32
    %c0 = arith.constant 0 : index
    %4 = arith.index_cast %3 : i32 to index
    %c0_0 = arith.constant 0 : index
    %5 = vector.load %arg2[%c0, %4, %c0_0] : memref<1x288x4xf32, #tpu.memory_space<vmem>>, vector<1x128x4xf32>
    %6 = vector.shape_cast %5 : vector<1x128x4xf32> to vector<128x4xf32>
    %c0_1 = arith.constant 0 : index
    %c0_2 = arith.constant 0 : index
    %c0_3 = arith.constant 0 : index
    %7 = vector.load %arg3[%c0_1, %c0_2, %c0_3] : memref<3x4x8xf32, #tpu.memory_space<vmem>>, vector<1x4x8xf32>
    %8 = vector.shape_cast %7 : vector<1x4x8xf32> to vector<4x8xf32>
    %cst = arith.constant dense<0.000000e+00> : vector<128x8xf32>
    %9 = tpu.matmul %6, %8, %cst {dimension_numbers = #tpu.dot_dimension_numbers<[1], [0], [0], [1], [0, 0, 1, 1], [], []>, precision = #tpu.contract_precision<fp32>} : vector<128x4xf32>, vector<4x8xf32>, vector<128x8xf32> -> vector<128x8xf32>
    %c16_i32_4 = arith.constant 16 : i32
    %10 = arith.addi %1, %c16_i32_4 : i32
    %11 = tpu.assume_multiple %10, 8 : i32
    %c0_5 = arith.constant 0 : index
    %12 = arith.index_cast %11 : i32 to index
    %c0_6 = arith.constant 0 : index
    %13 = vector.load %arg2[%c0_5, %12, %c0_6] : memref<1x288x4xf32, #tpu.memory_space<vmem>>, vector<1x128x4xf32>
    %14 = vector.shape_cast %13 : vector<1x128x4xf32> to vector<128x4xf32>
    %c1 = arith.constant 1 : index
    %c0_7 = arith.constant 0 : index
    %c0_8 = arith.constant 0 : index
    %15 = vector.load %arg3[%c1, %c0_7, %c0_8] : memref<3x4x8xf32, #tpu.memory_space<vmem>>, vector<1x4x8xf32>
    %16 = vector.shape_cast %15 : vector<1x4x8xf32> to vector<4x8xf32>
    %cst_9 = arith.constant dense<0.000000e+00> : vector<128x8xf32>
    %17 = tpu.matmul %14, %16, %cst_9 {dimension_numbers = #tpu.dot_dimension_numbers<[1], [0], [0], [1], [0, 0, 1, 1], [], []>, precision = #tpu.contract_precision<fp32>} : vector<128x4xf32>, vector<4x8xf32>, vector<128x8xf32> -> vector<128x8xf32>
    %18 = arith.addf %9, %17 : vector<128x8xf32>
    %c32_i32 = arith.constant 32 : i32
    %19 = arith.addi %1, %c32_i32 : i32
    %20 = tpu.assume_multiple %19, 8 : i32
    %c0_10 = arith.constant 0 : index
    %21 = arith.index_cast %20 : i32 to index
    %c0_11 = arith.constant 0 : index
    %22 = vector.load %arg2[%c0_10, %21, %c0_11] : memref<1x288x4xf32, #tpu.memory_space<vmem>>, vector<1x128x4xf32>
    %23 = vector.shape_cast %22 : vector<1x128x4xf32> to vector<128x4xf32>
    %c2 = arith.constant 2 : index
    %c0_12 = arith.constant 0 : index
    %c0_13 = arith.constant 0 : index
    %24 = vector.load %arg3[%c2, %c0_12, %c0_13] : memref<3x4x8xf32, #tpu.memory_space<vmem>>, vector<1x4x8xf32>
    %25 = vector.shape_cast %24 : vector<1x4x8xf32> to vector<4x8xf32>
    %cst_14 = arith.constant dense<0.000000e+00> : vector<128x8xf32>
    %26 = tpu.matmul %23, %25, %cst_14 {dimension_numbers = #tpu.dot_dimension_numbers<[1], [0], [0], [1], [0, 0, 1, 1], [], []>, precision = #tpu.contract_precision<fp32>} : vector<128x4xf32>, vector<4x8xf32>, vector<128x8xf32> -> vector<128x8xf32>
    %27 = arith.addf %18, %26 : vector<128x8xf32>
    %c0_15 = arith.constant 0 : index
    %c0_16 = arith.constant 0 : index
    %28 = vector.load %arg4[%c0_15, %c0_16] : memref<1x8xf32, #tpu.memory_space<vmem>>, vector<1x8xf32>
    %29 = vector.broadcast %28 : vector<1x8xf32> to vector<128x8xf32>
    %30 = arith.addf %27, %29 : vector<128x8xf32>
    %cst_17 = arith.constant 0.000000e+00 : f32
    %31 = vector.broadcast %cst_17 : f32 to vector<128x8xf32>
    %32 = arith.maximumf %30, %31 : vector<128x8xf32>
    %c0_18 = arith.constant 0 : index
    %c0_19 = arith.constant 0 : index
    %c0_20 = arith.constant 0 : index
    %33 = vector.load %arg5[%c0_18, %c0_19, %c0_20] : memref<1x128x8xf32, #tpu.memory_space<vmem>>, vector<1x128x8xf32>
    %34 = vector.shape_cast %33 : vector<1x128x8xf32> to vector<128x8xf32>
    %35 = vector.shape_cast %32 : vector<128x8xf32> to vector<1x128x8xf32>
    tpu.vector_store %arg5[%c0_18, %c0_19, %c0_20], %35 {strides = array<i32>} : memref<1x128x8xf32, #tpu.memory_space<vmem>>, vector<1x128x8xf32>,
    return
  }
  func.func @transform_0(%arg0: i32, %arg1: i32) -> (i32, i32, i32) {
    %c0_i32 = arith.constant 0 : i32
    %c0_i32_0 = arith.constant 0 : i32
    %c0_i32_1 = arith.constant 0 : i32
    return %arg0, %c0_i32, %c0_i32_0 : i32, i32, i32
  }
  func.func @transform_1(%arg0: i32, %arg1: i32) -> (i32, i32, i32) {
    %c0_i32 = arith.constant 0 : i32
    %c0_i32_0 = arith.constant 0 : i32
    %c0_i32_1 = arith.constant 0 : i32
    %c0_i32_2 = arith.constant 0 : i32
    return %c0_i32, %c0_i32_0, %c0_i32_1 : i32, i32, i32
  }
  func.func @transform_2(%arg0: i32, %arg1: i32) -> (i32, i32) {
    %c0_i32 = arith.constant 0 : i32
    %c0_i32_0 = arith.constant 0 : i32
    %c0_i32_1 = arith.constant 0 : i32
    return %c0_i32, %c0_i32_0 : i32, i32
  }
  func.func @transform_3(%arg0: i32, %arg1: i32) -> (i32, i32, i32) {
    %c0_i32 = arith.constant 0 : i32
    %c0_i32_0 = arith.constant 0 : i32
    return %arg0, %arg1, %c0_i32 : i32, i32, i32
  }
}

</mosaic_0001>

<llo_original>
// kernel: tpu_custom_call.1
$region0: #{tpu_custom_call.1}
  #allocation0 [shape = 'u32[]', space=smem, size = 0x4, offset = 0x4, fixed_abs, tag = 'smem constant byte address 0x4 - core index']
  #allocation1 [shape = 'u32[72,128]{1,0:T(1,128)}', space=vmem, size = 0x9000, scoped, tag = 'internal scratch']
  %s0 = inlined_call_operand.vmem [shape: f32[2,288,4], index: 0, kind: input, shape index: {}]
  %s1 = inlined_call_operand.vmem [shape: f32[3,4,8], index: 1, kind: input, shape index: {}]
  %s2 = inlined_call_operand.vmem [shape: f32[1,8], index: 2, kind: input, shape index: {}]
  %s3 = inlined_call_operand.vmem [shape: f32[2,256,8], index: 3, kind: output, shape index: {}]
  %s4 = sld [smem:[#allocation0]]
  $region45: #{tpu_custom_call.1} parent=0
    _
  %s6 = ssub.s32 1, %s4
  %s7 = scalar_select 0, %s6, %s4
  loop: start=0, step=1, limit=6
  $region2: #{tpu_custom_call.1} parent=0 // loop_pre_header
    _
  $region3: #{tpu_custom_call.1} parent=0 // loop_header
    %s9 = sphi 0, %s13
    %p10 = scmp.ge.s32.totalorder %s9, 6
    %s16 = sphi 0, %s28
    %s17 = sphi 0, %s24
    %s18 = sphi 0, %s16
    %s19 = sphi 0, %s17
    %s20 = sphi 0, %s18
    %s21 = sphi 0, %s19
    %s31 = sphi 0, %s33
    %s34 = sphi 0, %s31
    %s35 = sphi 0, %s34
    %s51 = sphi 0, %s35
    %s55 = sphi 0, %s55
    %s57 = sphi 0, %s55
    %s58 = sphi 0, %s57
    %s72 = sphi 0, %s58
    %s76 = sphi 0, %s76
    %s78 = sphi 0, %s76
    %s79 = sphi 0, %s78
    %s93 = sphi 0, %s79
    %s101 = sphi 0, %s103
    %s104 = sphi 0, %s101
    %s105 = sphi 0, %s104
    %s121 = sphi 0, %s105
  $region4: #{tpu_custom_call.1} parent=0 // loop_header_branch
    %12 = sbr.rel (%p10) target = $region8
  $region5: #{tpu_custom_call.1} parent=0 // loop_body
    %s14 = ssub.s32 %s9, 1
    %s15 = ssub.s32 %s9, 2
    %s22 = sadd.s32 1, %s17
    %p23 = scmp.ge.s32.totalorder %s22, 2
    %s24 = scalar_select %p23, 0, %s22
    %s25 = sadd.s32 1, %s16
    %s26 = scalar_select %p23, %s25, %s16
    %p27 = scmp.ge.s32.totalorder %s26, 2
    %s28 = scalar_select %p27, 0, %s26
    %s29 = ssub.s32 %s16, %s28
    %p30 = scmp.eq.s32.totalorder %s29, 0
    %s32 = sadd.s32 %s31, 1
    %s33 = scalar_select %p30, %s31, %s32
    %p36 = pneg %p30
    %p37 = scmp.eq.s32.totalorder %s9, 3
    %p38 = por %p36, %p37
    %p39 = scmp.ne.s32.totalorder %s31, %s34
    %p40 = scmp.eq.s32.totalorder %s9, 0
    %p41 = por %p39, %p40
    %p42 = scmp.ne.s32.totalorder %s31, %s34
    %p43 = scmp.eq.s32.totalorder %s14, 3
    %p44 = por %p42, %p43
    %p45 = scmp.ne.s32.totalorder %s34, %s35
    %p46 = scmp.eq.s32.totalorder %s14, 0
    %p47 = por %p45, %p46
    %p48 = scmp.ne.s32.totalorder %s34, %s35
    %p49 = scmp.eq.s32.totalorder %s15, 3
    %p50 = por %p48, %p49
    %p52 = scmp.ne.s32.totalorder %s35, %s51
    %p53 = scmp.eq.s32.totalorder %s15, 0
    %p54 = por %p52, %p53
    %s56 = sadd.s32 %s55, 1
    %p59 = scmp.eq.s32.totalorder %s9, 3
    %p60 = scmp.ne.s32.totalorder %s55, %s57
    %p61 = scmp.eq.s32.totalorder %s9, 0
    %p62 = por %p60, %p61
    %p63 = scmp.ne.s32.totalorder %s55, %s57
    %p64 = scmp.eq.s32.totalorder %s14, 3
    %p65 = por %p63, %p64
    %p66 = scmp.ne.s32.totalorder %s57, %s58
    %p67 = scmp.eq.s32.totalorder %s14, 0
    %p68 = por %p66, %p67
    %p69 = scmp.ne.s32.totalorder %s57, %s58
    %p70 = scmp.eq.s32.totalorder %s15, 3
    %p71 = por %p69, %p70
    %p73 = scmp.ne.s32.totalorder %s58, %s72
    %p74 = scmp.eq.s32.totalorder %s15, 0
    %p75 = por %p73, %p74
    %s77 = sadd.s32 %s76, 1
    %p80 = scmp.eq.s32.totalorder %s9, 3
    %p81 = scmp.ne.s32.totalorder %s76, %s78
    %p82 = scmp.eq.s32.totalorder %s9, 0
    %p83 = por %p81, %p82
    %p84 = scmp.ne.s32.totalorder %s76, %s78
    %p85 = scmp.eq.s32.totalorder %s14, 3
    %p86 = por %p84, %p85
    %p87 = scmp.ne.s32.totalorder %s78, %s79
    %p88 = scmp.eq.s32.totalorder %s14, 0
    %p89 = por %p87, %p88
    %p90 = scmp.ne.s32.totalorder %s78, %s79
    %p91 = scmp.eq.s32.totalorder %s15, 3
    %p92 = por %p90, %p91
    %p94 = scmp.ne.s32.totalorder %s79, %s93
    %p95 = scmp.eq.s32.totalorder %s15, 0
    %p96 = por %p94, %p95
    %s97 = ssub.s32 %s16, %s28
    %s98 = ssub.s32 %s17, %s24
    %s99 = sor.u32 %s97, %s98
    %p100 = scmp.eq.s32.totalorder %s99, 0
    %s102 = sadd.s32 %s101, 1
    %s103 = scalar_select %p100, %s101, %s102
    %p106 = pneg %p100
    %p107 = scmp.eq.s32.totalorder %s9, 3
    %p108 = por %p106, %p107
    %p109 = scmp.ne.s32.totalorder %s101, %s104
    %p110 = scmp.eq.s32.totalorder %s9, 0
    %p111 = por %p109, %p110
    %p112 = scmp.ne.s32.totalorder %s101, %s104
    %p113 = scmp.eq.s32.totalorder %s14, 3
    %p114 = por %p112, %p113
    %p115 = scmp.ne.s32.totalorder %s104, %s105
    %p116 = scmp.eq.s32.totalorder %s14, 0
    %p117 = por %p115, %p116
    %p118 = scmp.ne.s32.totalorder %s104, %s105
    %p119 = scmp.eq.s32.totalorder %s15, 3
    %p120 = por %p118, %p119
    %p122 = scmp.ne.s32.totalorder %s105, %s121
    %p123 = scmp.eq.s32.totalorder %s15, 0
    %p124 = por %p122, %p123
    %p125 = scmp.le.s32.totalorder 1, %s9
    %p126 = scmp.lt.s32.totalorder %s9, 5
    %p127 = pnand %p125, %p126
    %p128 = pneg %p127
    // Predicated region
    $region9: #{tpu_custom_call.1} parent=5 // pred_check
      _
    $region10: #{tpu_custom_call.1} parent=5 // pred_check_branch
      %130 = sbr.rel (%p127) target = $region12
    $region11: #{tpu_custom_call.1} parent=5 // pred_region
      %s131 = ssub.s32 %s9, 1
      // Predicated region
      $region13: #{tpu_custom_call.1} parent=11 // pred_check
        %p132 = pneg %p68
      $region14: #{tpu_custom_call.1} parent=11 // pred_check_branch
        %134 = sbr.rel (%p132) target = $region16
      $region15: #{tpu_custom_call.1} parent=11 // pred_region
        _
      $region16: #{tpu_custom_call.1} parent=11 // pred_fallthru
        _
      // Predicated region
      $region17: #{tpu_custom_call.1} parent=11 // pred_check
        %p135 = pneg %p89
      $region18: #{tpu_custom_call.1} parent=11 // pred_check_branch
        %137 = sbr.rel (%p135) target = $region20
      $region19: #{tpu_custom_call.1} parent=11 // pred_region
        _
      $region20: #{tpu_custom_call.1} parent=11 // pred_fallthru
        _
    $region12: #{tpu_custom_call.1} parent=5 // pred_fallthru
      _
    %p138 = scmp.lt.s32.totalorder %s9, 4
    // Predicated region
    $region21: #{tpu_custom_call.1} parent=5 // pred_check
      %p139 = pneg %p138
    $region22: #{tpu_custom_call.1} parent=5 // pred_check_branch
      %141 = sbr.rel (%p139) target = $region24
    $region23: #{tpu_custom_call.1} parent=5 // pred_region
      // Predicated region
      $region25: #{tpu_custom_call.1} parent=23 // pred_check
        %p142 = pneg %p41
      $region26: #{tpu_custom_call.1} parent=23 // pred_check_branch
        %144 = sbr.rel (%p142) target = $region28
      $region27: #{tpu_custom_call.1} parent=23 // pred_region
        %p145 = scmp.lt.s32.totalorder %s16, 1
        %s146 = scalar_select %p145, %s16, 1
        %s147 = smul.addr %s146, 36
        %s148 = smul.addr %s147, 8
        %s149 = scalar_lea.vmem %s0, %s148
      $region28: #{tpu_custom_call.1} parent=23 // pred_fallthru
        _
    $region24: #{tpu_custom_call.1} parent=5 // pred_fallthru
      _
    %p150 = scmp.le.s32.totalorder 1, %s9
    %p151 = scmp.lt.s32.totalorder %s9, 5
    %p152 = pnand %p150, %p151
    %p153 = pneg %p152
    // Predicated region
    $region29: #{tpu_custom_call.1} parent=5 // pred_check
      _
    $region30: #{tpu_custom_call.1} parent=5 // pred_check_branch
      %155 = sbr.rel (%p152) target = $region32
    $region31: #{tpu_custom_call.1} parent=5 // pred_region
      %s156 = ssub.s32 %s9, 1
      %p157 = scmp.lt.s32.totalorder %s18, 1
      %s158 = scalar_select %p157, %s18, 1
      %s159 = smul.addr %s158, 36
      %s160 = smul.addr %s159, 8
      %s161 = scalar_lea.vmem %s0, %s160
      %p162 = pneg %p47
      %p163 = pneg %p44
      %p164 = pneg %p68
      %p165 = pneg %p65
      %p166 = pneg %p89
      %p167 = pneg %p86
      %p168 = pneg %p117
      %p169 = pneg %p114
      %s170 = smul.u32 16, %s19
      %p171 = scmp.lt.s32.totalorder %s18, 1
      %s172 = scalar_select %p171, %s18, 1
      %p173 = scmp.lt.s32.totalorder %s170, 31
      %s174 = scalar_select %p173, %s170, 31
      %s175 = smul.addr %s172, 32
      %s176 = sadd.s32 %s174, %s175
      %s177 = smul.addr %s176, 8
      %s178 = scalar_lea.vmem %s3, %s177
      %p179 = scmp.lt.s32.totalorder %s18, 1
      %s180 = scalar_select %p179, %s18, 1
      %s181 = smul.addr %s180, 36
      %s182 = smul.addr %s181, 8
      %s183 = scalar_lea.vmem %s0, %s182
      %s184 = smul.u32 16, %s19
      %p185 = scmp.lt.s32.totalorder %s18, 1
      %s186 = scalar_select %p185, %s18, 1
      %p187 = scmp.lt.s32.totalorder %s184, 31
      %s188 = scalar_select %p187, %s184, 31
      %s189 = smul.addr %s186, 32
      %s190 = sadd.s32 %s188, %s189
      %s191 = smul.addr %s190, 8
      %s192 = scalar_lea.vmem %s3, %s191
      %s193 = smul.u32 16, %s19
      %s194 = smul.u32 %s19, 128
      %s195 = scalar_lea.vmem %s183, %s194
      %v196 = vld [vmem:[%s195] sm:$0xff]
      %v197 = vld [vmem:[%s195 + $0x8] sm:$0xff]
      %v198 = vld [vmem:[%s195 + $0x10] sm:$0xff]
      %v199 = vld [vmem:[%s195 + $0x18] sm:$0xff]
      %v200 = vld [vmem:[%s195 + $0x20] sm:$0xff]
      %v201 = vld [vmem:[%s195 + $0x28] sm:$0xff]
      %v202 = vld [vmem:[%s195 + $0x30] sm:$0xff]
      %v203 = vld [vmem:[%s195 + $0x38] sm:$0xff]
      %v204 = vld [vmem:[%s195 + $0x40] sm:$0xff]
      %v205 = vld [vmem:[%s195 + $0x48] sm:$0xff]
      %v206 = vld [vmem:[%s195 + $0x50] sm:$0xff]
      %v207 = vld [vmem:[%s195 + $0x58] sm:$0xff]
      %v208 = vld [vmem:[%s195 + $0x60] sm:$0xff]
      %v209 = vld [vmem:[%s195 + $0x68] sm:$0xff]
      %v210 = vld [vmem:[%s195 + $0x70] sm:$0xff]
      %v211 = vld [vmem:[%s195 + $0x78] sm:$0xff]
      %v212 = vld [vmem:[%s1] sm:$0xf]
      %s213 = sadd.s32 %s194, 16
      %s214 = scalar_lea.vmem %s183, %s213
      %v215 = vld [vmem:[%s214] sm:$0xff]
      %v216 = vld [vmem:[%s214 + $0x8] sm:$0xff]
      %v217 = vld [vmem:[%s214 + $0x10] sm:$0xff]
      %v218 = vld [vmem:[%s214 + $0x18] sm:$0xff]
      %v219 = vld [vmem:[%s214 + $0x20] sm:$0xff]
      %v220 = vld [vmem:[%s214 + $0x28] sm:$0xff]
      %v221 = vld [vmem:[%s214 + $0x30] sm:$0xff]
      %v222 = vld [vmem:[%s214 + $0x38] sm:$0xff]
      %v223 = vld [vmem:[%s214 + $0x40] sm:$0xff]
      %v224 = vld [vmem:[%s214 + $0x48] sm:$0xff]
      %v225 = vld [vmem:[%s214 + $0x50] sm:$0xff]
      %v226 = vld [vmem:[%s214 + $0x58] sm:$0xff]
      %v227 = vld [vmem:[%s214 + $0x60] sm:$0xff]
      %v228 = vld [vmem:[%s214 + $0x68] sm:$0xff]
      %v229 = vld [vmem:[%s214 + $0x70] sm:$0xff]
      %v230 = vld [vmem:[%s214 + $0x78] sm:$0xff]
      %s231 = scalar_lea.vmem %s1, 4
      %v232 = vld [vmem:[%s231] sm:$0xf]
      %vm233 = vcmask 31744
      %v235 = vsel %vm233, %v215, 0
      %v238 = vsel %vm233, %v216, 0
      %v241 = vsel %vm233, %v217, 0
      %v244 = vsel %vm233, %v218, 0
      %v247 = vsel %vm233, %v219, 0
      %v250 = vsel %vm233, %v220, 0
      %v253 = vsel %vm233, %v221, 0
      %v256 = vsel %vm233, %v222, 0
      %v259 = vsel %vm233, %v223, 0
      %v262 = vsel %vm233, %v224, 0
      %v265 = vsel %vm233, %v225, 0
      %v268 = vsel %vm233, %v226, 0
      %v271 = vsel %vm233, %v227, 0
      %v274 = vsel %vm233, %v228, 0
      %v277 = vsel %vm233, %v229, 0
      %v280 = vsel %vm233, %v230, 0
      %vm282 = vcmask 1043456
      %v284 = vsel %vm282, %v232, 0
      %286 = vmatpush.msra.mxu0 0.0
      %287 = vmatpush.msra.mxu0 0.0
      %288 = vmatpush.msra.mxu0 0.0
      %289 = vmatpush.msra.mxu0 0.0
      %290 = vmatpush.msra.mxu0 0.0
      %291 = vmatpush.msra.mxu0 0.0
      %292 = vmatpush.msra.mxu0 0.0
      %293 = vmatpush.msra.mxu0 0.0
      %294 = vmatpush.msra.mxu0 0.0
      %295 = vmatpush.msra.mxu0 0.0
      %296 = vmatpush.msra.mxu0 0.0
      %297 = vmatpush.msra.mxu0 0.0
      %298 = vmatpush.msra.mxu0 0.0
      %299 = vmatpush.msra.mxu0 0.0
      %300 = vmatpush.msra.mxu0 0.0
      %v301 = vand.u32 %v284, 4294901760
      %302 = vmatpush.msra.mxu0 %v301
      %v303 = vand.u32 %v235, 4294901760
      %v304 = vsub.f32 %v235, %v303
      %v305 = vand.u32 %v304, 4294901760
      %v306 = vsub.f32 %v304, %v305
      %v307 = vand.u32 %v306, 4294901760
      %308 = vmatmul.f32.gmra.mxu0 %v307
      %v309 = vpop.f32.mrf.mxu0
      %v310 = vadd.f32 0.0, %v309
      %v311 = vand.u32 %v238, 4294901760
      %v312 = vsub.f32 %v238, %v311
      %v313 = vand.u32 %v312, 4294901760
      %v314 = vsub.f32 %v312, %v313
      %v315 = vand.u32 %v314, 4294901760
      %316 = vmatmul.f32.gmra.mxu0 %v315
      %v317 = vpop.f32.mrf.mxu0
      %v318 = vadd.f32 0.0, %v317
      %v319 = vand.u32 %v241, 4294901760
      %v320 = vsub.f32 %v241, %v319
      %v321 = vand.u32 %v320, 4294901760
      %v322 = vsub.f32 %v320, %v321
      %v323 = vand.u32 %v322, 4294901760
      %324 = vmatmul.f32.gmra.mxu0 %v323
      %v325 = vpop.f32.mrf.mxu0
      %v326 = vadd.f32 0.0, %v325
      %v327 = vand.u32 %v244, 4294901760
      %v328 = vsub.f32 %v244, %v327
      %v329 = vand.u32 %v328, 4294901760
      %v330 = vsub.f32 %v328, %v329
      %v331 = vand.u32 %v330, 4294901760
      %332 = vmatmul.f32.gmra.mxu0 %v331
      %v333 = vpop.f32.mrf.mxu0
      %v334 = vadd.f32 0.0, %v333
      %v335 = vand.u32 %v247, 4294901760
      %v336 = vsub.f32 %v247, %v335
      %v337 = vand.u32 %v336, 4294901760
      %v338 = vsub.f32 %v336, %v337
      %v339 = vand.u32 %v338, 4294901760
      %340 = vmatmul.f32.gmra.mxu0 %v339
      %v341 = vpop.f32.mrf.mxu0
      %v342 = vadd.f32 0.0, %v341
      %v343 = vand.u32 %v250, 4294901760
      %v344 = vsub.f32 %v250, %v343
      %v345 = vand.u32 %v344, 4294901760
      %v346 = vsub.f32 %v344, %v345
      %v347 = vand.u32 %v346, 4294901760
      %348 = vmatmul.f32.gmra.mxu0 %v347
      %v349 = vpop.f32.mrf.mxu0
      %v350 = vadd.f32 0.0, %v349
      %v351 = vand.u32 %v253, 4294901760
      %v352 = vsub.f32 %v253, %v351
      %v353 = vand.u32 %v352, 4294901760
      %v354 = vsub.f32 %v352, %v353
      %v355 = vand.u32 %v354, 4294901760
      %356 = vmatmul.f32.gmra.mxu0 %v355
      %v357 = vpop.f32.mrf.mxu0
      %v358 = vadd.f32 0.0, %v357
      %v359 = vand.u32 %v256, 4294901760
      %v360 = vsub.f32 %v256, %v359
      %v361 = vand.u32 %v360, 4294901760
      %v362 = vsub.f32 %v360, %v361
      %v363 = vand.u32 %v362, 4294901760
      %364 = vmatmul.f32.gmra.mxu0 %v363
      %v365 = vpop.f32.mrf.mxu0
      %v366 = vadd.f32 0.0, %v365
      %v367 = vand.u32 %v259, 4294901760
      %v368 = vsub.f32 %v259, %v367
      %v369 = vand.u32 %v368, 4294901760
      %v370 = vsub.f32 %v368, %v369
      %v371 = vand.u32 %v370, 4294901760
      %372 = vmatmul.f32.gmra.mxu0 %v371
      %v373 = vpop.f32.mrf.mxu0
      %v374 = vadd.f32 0.0, %v373
      %v375 = vand.u32 %v262, 4294901760
      %v376 = vsub.f32 %v262, %v375
      %v377 = vand.u32 %v376, 4294901760
      %v378 = vsub.f32 %v376, %v377
      %v379 = vand.u32 %v378, 4294901760
      %380 = vmatmul.f32.gmra.mxu0 %v379
      %v381 = vpop.f32.mrf.mxu0
      %v382 = vadd.f32 0.0, %v381
      %v383 = vand.u32 %v265, 4294901760
      %v384 = vsub.f32 %v265, %v383
      %v385 = vand.u32 %v384, 4294901760
      %v386 = vsub.f32 %v384, %v385
      %v387 = vand.u32 %v386, 4294901760
      %388 = vmatmul.f32.gmra.mxu0 %v387
      %v389 = vpop.f32.mrf.mxu0
      %v390 = vadd.f32 0.0, %v389
      %v391 = vand.u32 %v268, 4294901760
      %v392 = vsub.f32 %v268, %v391
      %v393 = vand.u32 %v392, 4294901760
      %v394 = vsub.f32 %v392, %v393
      %v395 = vand.u32 %v394, 4294901760
      %396 = vmatmul.f32.gmra.mxu0 %v395
      %v397 = vpop.f32.mrf.mxu0
      %v398 = vadd.f32 0.0, %v397
      %v399 = vand.u32 %v271, 4294901760
      %v400 = vsub.f32 %v271, %v399
      %v401 = vand.u32 %v400, 4294901760
      %v402 = vsub.f32 %v400, %v401
      %v403 = vand.u32 %v402, 4294901760
      %404 = vmatmul.f32.gmra.mxu0 %v403
      %v405 = vpop.f32.mrf.mxu0
      %v406 = vadd.f32 0.0, %v405
      %v407 = vand.u32 %v274, 4294901760
      %v408 = vsub.f32 %v274, %v407
      %v409 = vand.u32 %v408, 4294901760
      %v410 = vsub.f32 %v408, %v409
      %v411 = vand.u32 %v410, 4294901760
      %412 = vmatmul.f32.gmra.mxu0 %v411
      %v413 = vpop.f32.mrf.mxu0
      %v414 = vadd.f32 0.0, %v413
      %v415 = vand.u32 %v277, 4294901760
      %v416 = vsub.f32 %v277, %v415
      %v417 = vand.u32 %v416, 4294901760
      %v418 = vsub.f32 %v416, %v417
      %v419 = vand.u32 %v418, 4294901760
      %420 = vmatmul.f32.gmra.mxu0 %v419
      %v421 = vpop.f32.mrf.mxu0
      %v422 = vadd.f32 0.0, %v421
      %v423 = vand.u32 %v280, 4294901760
      %v424 = vsub.f32 %v280, %v423
      %v425 = vand.u32 %v424, 4294901760
      %v426 = vsub.f32 %v424, %v425
      %v427 = vand.u32 %v426, 4294901760
      %428 = vmatmul.f32.gmra.mxu0 %v427
      %v429 = vpop.f32.mrf.mxu0
      %v430 = vadd.f32 0.0, %v429
      %431 = vdwg.mxu0
      %432 = vmatpush.msra.mxu0 0.0
      %433 = vmatpush.msra.mxu0 0.0
      %434 = vmatpush.msra.mxu0 0.0
      %435 = vmatpush.msra.mxu0 0.0
      %436 = vmatpush.msra.mxu0 0.0
      %437 = vmatpush.msra.mxu0 0.0
      %438 = vmatpush.msra.mxu0 0.0
      %439 = vmatpush.msra.mxu0 0.0
      %440 = vmatpush.msra.mxu0 0.0
      %441 = vmatpush.msra.mxu0 0.0
      %442 = vmatpush.msra.mxu0 0.0
      %443 = vmatpush.msra.mxu0 0.0
      %444 = vmatpush.msra.mxu0 0.0
      %445 = vmatpush.msra.mxu0 0.0
      %446 = vmatpush.msra.mxu0 0.0
      %v447 = vand.u32 %v284, 4294901760
      %v448 = vsub.f32 %v284, %v447
      %v449 = vand.u32 %v448, 4294901760
      %v450 = vsub.f32 %v448, %v449
      %v451 = vand.u32 %v450, 4294901760
      %452 = vmatpush.msra.mxu0 %v451
      %v453 = vand.u32 %v235, 4294901760
      %454 = vmatmul.f32.gmra.mxu0 %v453
      %v455 = vpop.f32.mrf.mxu0
      %v456 = vadd.f32 %v310, %v455
      %v457 = vand.u32 %v238, 4294901760
      %458 = vmatmul.f32.gmra.mxu0 %v457
      %v459 = vpop.f32.mrf.mxu0
      %v460 = vadd.f32 %v318, %v459
      %v461 = vand.u32 %v241, 4294901760
      %462 = vmatmul.f32.gmra.mxu0 %v461
      %v463 = vpop.f32.mrf.mxu0
      %v464 = vadd.f32 %v326, %v463
      %v465 = vand.u32 %v244, 4294901760
      %466 = vmatmul.f32.gmra.mxu0 %v465
      %v467 = vpop.f32.mrf.mxu0
      %v468 = vadd.f32 %v334, %v467
      %v469 = vand.u32 %v247, 4294901760
      %470 = vmatmul.f32.gmra.mxu0 %v469
      %v471 = vpop.f32.mrf.mxu0
      %v472 = vadd.f32 %v342, %v471
      %v473 = vand.u32 %v250, 4294901760
      %474 = vmatmul.f32.gmra.mxu0 %v473
      %v475 = vpop.f32.mrf.mxu0
      %v476 = vadd.f32 %v350, %v475
      %v477 = vand.u32 %v253, 4294901760
      %478 = vmatmul.f32.gmra.mxu0 %v477
      %v479 = vpop.f32.mrf.mxu0
      %v480 = vadd.f32 %v358, %v479
      %v481 = vand.u32 %v256, 4294901760
      %482 = vmatmul.f32.gmra.mxu0 %v481
      %v483 = vpop.f32.mrf.mxu0
      %v484 = vadd.f32 %v366, %v483
      %v485 = vand.u32 %v259, 4294901760
      %486 = vmatmul.f32.gmra.mxu0 %v485
      %v487 = vpop.f32.mrf.mxu0
      %v488 = vadd.f32 %v374, %v487
      %v489 = vand.u32 %v262, 4294901760
      %490 = vmatmul.f32.gmra.mxu0 %v489
      %v491 = vpop.f32.mrf.mxu0
      %v492 = vadd.f32 %v382, %v491
      %v493 = vand.u32 %v265, 4294901760
      %494 = vmatmul.f32.gmra.mxu0 %v493
      %v495 = vpop.f32.mrf.mxu0
      %v496 = vadd.f32 %v390, %v495
      %v497 = vand.u32 %v268, 4294901760
      %498 = vmatmul.f32.gmra.mxu0 %v497
      %v499 = vpop.f32.mrf.mxu0
      %v500 = vadd.f32 %v398, %v499
      %v501 = vand.u32 %v271, 4294901760
      %502 = vmatmul.f32.gmra.mxu0 %v501
      %v503 = vpop.f32.mrf.mxu0
      %v504 = vadd.f32 %v406, %v503
      %v505 = vand.u32 %v274, 4294901760
      %506 = vmatmul.f32.gmra.mxu0 %v505
      %v507 = vpop.f32.mrf.mxu0
      %v508 = vadd.f32 %v414, %v507
      %v509 = vand.u32 %v277, 4294901760
      %510 = vmatmul.f32.gmra.mxu0 %v509
      %v511 = vpop.f32.mrf.mxu0
      %v512 = vadd.f32 %v422, %v511
      %v513 = vand.u32 %v280, 4294901760
      %514 = vmatmul.f32.gmra.mxu0 %v513
      %v515 = vpop.f32.mrf.mxu0
      %v516 = vadd.f32 %v430, %v515
      %517 = vdwg.mxu0
      %518 = vmatpush.msra.mxu0 0.0
      %519 = vmatpush.msra.mxu0 0.0
      %520 = vmatpush.msra.mxu0 0.0
      %521 = vmatpush.msra.mxu0 0.0
      %522 = vmatpush.msra.mxu0 0.0
      %523 = vmatpush.msra.mxu0 0.0
      %524 = vmatpush.msra.mxu0 0.0
      %525 = vmatpush.msra.mxu0 0.0
      %526 = vmatpush.msra.mxu0 0.0
      %527 = vmatpush.msra.mxu0 0.0
      %528 = vmatpush.msra.mxu0 0.0
      %529 = vmatpush.msra.mxu0 0.0
      %530 = vmatpush.msra.mxu0 0.0
      %531 = vmatpush.msra.mxu0 0.0
      %532 = vmatpush.msra.mxu0 0.0
      %v533 = vand.u32 %v284, 4294901760
      %v534 = vsub.f32 %v284, %v533
      %535 = vmatpush.msra.mxu0 %v534
      %v536 = vand.u32 %v235, 4294901760
      %v537 = vsub.f32 %v235, %v536
      %538 = vmatmul.f32.gmra.mxu0 %v537
      %v539 = vpop.f32.mrf.mxu0
      %v540 = vadd.f32 %v456, %v539
      %v541 = vand.u32 %v238, 4294901760
      %v542 = vsub.f32 %v238, %v541
      %543 = vmatmul.f32.gmra.mxu0 %v542
      %v544 = vpop.f32.mrf.mxu0
      %v545 = vadd.f32 %v460, %v544
      %v546 = vand.u32 %v241, 4294901760
      %v547 = vsub.f32 %v241, %v546
      %548 = vmatmul.f32.gmra.mxu0 %v547
      %v549 = vpop.f32.mrf.mxu0
      %v550 = vadd.f32 %v464, %v549
      %v551 = vand.u32 %v244, 4294901760
      %v552 = vsub.f32 %v244, %v551
      %553 = vmatmul.f32.gmra.mxu0 %v552
      %v554 = vpop.f32.mrf.mxu0
      %v555 = vadd.f32 %v468, %v554
      %v556 = vand.u32 %v247, 4294901760
      %v557 = vsub.f32 %v247, %v556
      %558 = vmatmul.f32.gmra.mxu0 %v557
      %v559 = vpop.f32.mrf.mxu0
      %v560 = vadd.f32 %v472, %v559
      %v561 = vand.u32 %v250, 4294901760
      %v562 = vsub.f32 %v250, %v561
      %563 = vmatmul.f32.gmra.mxu0 %v562
      %v564 = vpop.f32.mrf.mxu0
      %v565 = vadd.f32 %v476, %v564
      %v566 = vand.u32 %v253, 4294901760
      %v567 = vsub.f32 %v253, %v566
      %568 = vmatmul.f32.gmra.mxu0 %v567
      %v569 = vpop.f32.mrf.mxu0
      %v570 = vadd.f32 %v480, %v569
      %v571 = vand.u32 %v256, 4294901760
      %v572 = vsub.f32 %v256, %v571
      %573 = vmatmul.f32.gmra.mxu0 %v572
      %v574 = vpop.f32.mrf.mxu0
      %v575 = vadd.f32 %v484, %v574
      %v576 = vand.u32 %v259, 4294901760
      %v577 = vsub.f32 %v259, %v576
      %578 = vmatmul.f32.gmra.mxu0 %v577
      %v579 = vpop.f32.mrf.mxu0
      %v580 = vadd.f32 %v488, %v579
      %v581 = vand.u32 %v262, 4294901760
      %v582 = vsub.f32 %v262, %v581
      %583 = vmatmul.f32.gmra.mxu0 %v582
      %v584 = vpop.f32.mrf.mxu0
      %v585 = vadd.f32 %v492, %v584
      %v586 = vand.u32 %v265, 4294901760
      %v587 = vsub.f32 %v265, %v586
      %588 = vmatmul.f32.gmra.mxu0 %v587
      %v589 = vpop.f32.mrf.mxu0
      %v590 = vadd.f32 %v496, %v589
      %v591 = vand.u32 %v268, 4294901760
      %v592 = vsub.f32 %v268, %v591
      %593 = vmatmul.f32.gmra.mxu0 %v592
      %v594 = vpop.f32.mrf.mxu0
      %v595 = vadd.f32 %v500, %v594
      %v596 = vand.u32 %v271, 4294901760
      %v597 = vsub.f32 %v271, %v596
      %598 = vmatmul.f32.gmra.mxu0 %v597
      %v599 = vpop.f32.mrf.mxu0
      %v600 = vadd.f32 %v504, %v599
      %v601 = vand.u32 %v274, 4294901760
      %v602 = vsub.f32 %v274, %v601
      %603 = vmatmul.f32.gmra.mxu0 %v602
      %v604 = vpop.f32.mrf.mxu0
      %v605 = vadd.f32 %v508, %v604
      %v606 = vand.u32 %v277, 4294901760
      %v607 = vsub.f32 %v277, %v606
      %608 = vmatmul.f32.gmra.mxu0 %v607
      %v609 = vpop.f32.mrf.mxu0
      %v610 = vadd.f32 %v512, %v609
      %v611 = vand.u32 %v280, 4294901760
      %v612 = vsub.f32 %v280, %v611
      %613 = vmatmul.f32.gmra.mxu0 %v612
      %v614 = vpop.f32.mrf.mxu0
      %v615 = vadd.f32 %v516, %v614
      %616 = vdwg.mxu0
      %617 = vmatpush.msra.mxu0 0.0
      %618 = vmatpush.msra.mxu0 0.0
      %619 = vmatpush.msra.mxu0 0.0
      %620 = vmatpush.msra.mxu0 0.0
      %621 = vmatpush.msra.mxu0 0.0
      %622 = vmatpush.msra.mxu0 0.0
      %623 = vmatpush.msra.mxu0 0.0
      %624 = vmatpush.msra.mxu0 0.0
      %625 = vmatpush.msra.mxu0 0.0
      %626 = vmatpush.msra.mxu0 0.0
      %627 = vmatpush.msra.mxu0 0.0
      %628 = vmatpush.msra.mxu0 0.0
      %629 = vmatpush.msra.mxu0 0.0
      %630 = vmatpush.msra.mxu0 0.0
      %631 = vmatpush.msra.mxu0 0.0
      %v632 = vand.u32 %v284, 4294901760
      %633 = vmatpush.msra.mxu0 %v632
      %v634 = vand.u32 %v235, 4294901760
      %v635 = vsub.f32 %v235, %v634
      %v636 = vand.u32 %v635, 4294901760
      %637 = vmatmul.f32.gmra.mxu0 %v636
      %v638 = vpop.f32.mrf.mxu0
      %v639 = vadd.f32 %v540, %v638
      %v640 = vand.u32 %v238, 4294901760
      %v641 = vsub.f32 %v238, %v640
      %v642 = vand.u32 %v641, 4294901760
      %643 = vmatmul.f32.gmra.mxu0 %v642
      %v644 = vpop.f32.mrf.mxu0
      %v645 = vadd.f32 %v545, %v644
      %v646 = vand.u32 %v241, 4294901760
      %v647 = vsub.f32 %v241, %v646
      %v648 = vand.u32 %v647, 4294901760
      %649 = vmatmul.f32.gmra.mxu0 %v648
      %v650 = vpop.f32.mrf.mxu0
      %v651 = vadd.f32 %v550, %v650
      %v652 = vand.u32 %v244, 4294901760
      %v653 = vsub.f32 %v244, %v652
      %v654 = vand.u32 %v653, 4294901760
      %655 = vmatmul.f32.gmra.mxu0 %v654
      %v656 = vpop.f32.mrf.mxu0
      %v657 = vadd.f32 %v555, %v656
      %v658 = vand.u32 %v247, 4294901760
      %v659 = vsub.f32 %v247, %v658
      %v660 = vand.u32 %v659, 4294901760
      %661 = vmatmul.f32.gmra.mxu0 %v660
      %v662 = vpop.f32.mrf.mxu0
      %v663 = vadd.f32 %v560, %v662
      %v664 = vand.u32 %v250, 4294901760
      %v665 = vsub.f32 %v250, %v664
      %v666 = vand.u32 %v665, 4294901760
      %667 = vmatmul.f32.gmra.mxu0 %v666
      %v668 = vpop.f32.mrf.mxu0
      %v669 = vadd.f32 %v565, %v668
      %v670 = vand.u32 %v253, 4294901760
      %v671 = vsub.f32 %v253, %v670
      %v672 = vand.u32 %v671, 4294901760
      %673 = vmatmul.f32.gmra.mxu0 %v672
      %v674 = vpop.f32.mrf.mxu0
      %v675 = vadd.f32 %v570, %v674
      %v676 = vand.u32 %v256, 4294901760
      %v677 = vsub.f32 %v256, %v676
      %v678 = vand.u32 %v677, 4294901760
      %679 = vmatmul.f32.gmra.mxu0 %v678
      %v680 = vpop.f32.mrf.mxu0
      %v681 = vadd.f32 %v575, %v680
      %v682 = vand.u32 %v259, 4294901760
      %v683 = vsub.f32 %v259, %v682
      %v684 = vand.u32 %v683, 4294901760
      %685 = vmatmul.f32.gmra.mxu0 %v684
      %v686 = vpop.f32.mrf.mxu0
      %v687 = vadd.f32 %v580, %v686
      %v688 = vand.u32 %v262, 4294901760
      %v689 = vsub.f32 %v262, %v688
      %v690 = vand.u32 %v689, 4294901760
      %691 = vmatmul.f32.gmra.mxu0 %v690
      %v692 = vpop.f32.mrf.mxu0
      %v693 = vadd.f32 %v585, %v692
      %v694 = vand.u32 %v265, 4294901760
      %v695 = vsub.f32 %v265, %v694
      %v696 = vand.u32 %v695, 4294901760
      %697 = vmatmul.f32.gmra.mxu0 %v696
      %v698 = vpop.f32.mrf.mxu0
      %v699 = vadd.f32 %v590, %v698
      %v700 = vand.u32 %v268, 4294901760
      %v701 = vsub.f32 %v268, %v700
      %v702 = vand.u32 %v701, 4294901760
      %703 = vmatmul.f32.gmra.mxu0 %v702
      %v704 = vpop.f32.mrf.mxu0
      %v705 = vadd.f32 %v595, %v704
      %v706 = vand.u32 %v271, 4294901760
      %v707 = vsub.f32 %v271, %v706
      %v708 = vand.u32 %v707, 4294901760
      %709 = vmatmul.f32.gmra.mxu0 %v708
      %v710 = vpop.f32.mrf.mxu0
      %v711 = vadd.f32 %v600, %v710
      %v712 = vand.u32 %v274, 4294901760
      %v713 = vsub.f32 %v274, %v712
      %v714 = vand.u32 %v713, 4294901760
      %715 = vmatmul.f32.gmra.mxu0 %v714
      %v716 = vpop.f32.mrf.mxu0
      %v717 = vadd.f32 %v605, %v716
      %v718 = vand.u32 %v277, 4294901760
      %v719 = vsub.f32 %v277, %v718
      %v720 = vand.u32 %v719, 4294901760
      %721 = vmatmul.f32.gmra.mxu0 %v720
      %v722 = vpop.f32.mrf.mxu0
      %v723 = vadd.f32 %v610, %v722
      %v724 = vand.u32 %v280, 4294901760
      %v725 = vsub.f32 %v280, %v724
      %v726 = vand.u32 %v725, 4294901760
      %727 = vmatmul.f32.gmra.mxu0 %v726
      %v728 = vpop.f32.mrf.mxu0
      %v729 = vadd.f32 %v615, %v728
      %730 = vdwg.mxu0
      %731 = vmatpush.msra.mxu0 0.0
      %732 = vmatpush.msra.mxu0 0.0
      %733 = vmatpush.msra.mxu0 0.0
      %734 = vmatpush.msra.mxu0 0.0
      %735 = vmatpush.msra.mxu0 0.0
      %736 = vmatpush.msra.mxu0 0.0
      %737 = vmatpush.msra.mxu0 0.0
      %738 = vmatpush.msra.mxu0 0.0
      %739 = vmatpush.msra.mxu0 0.0
      %740 = vmatpush.msra.mxu0 0.0
      %741 = vmatpush.msra.mxu0 0.0
      %742 = vmatpush.msra.mxu0 0.0
      %743 = vmatpush.msra.mxu0 0.0
      %744 = vmatpush.msra.mxu0 0.0
      %745 = vmatpush.msra.mxu0 0.0
      %v746 = vand.u32 %v284, 4294901760
      %v747 = vsub.f32 %v284, %v746
      %v748 = vand.u32 %v747, 4294901760
      %749 = vmatpush.msra.mxu0 %v748
      %v750 = vand.u32 %v235, 4294901760
      %751 = vmatmul.f32.gmra.mxu0 %v750
      %v752 = vpop.f32.mrf.mxu0
      %v753 = vadd.f32 %v639, %v752
      %v754 = vand.u32 %v238, 4294901760
      %755 = vmatmul.f32.gmra.mxu0 %v754
      %v756 = vpop.f32.mrf.mxu0
      %v757 = vadd.f32 %v645, %v756
      %v758 = vand.u32 %v241, 4294901760
      %759 = vmatmul.f32.gmra.mxu0 %v758
      %v760 = vpop.f32.mrf.mxu0
      %v761 = vadd.f32 %v651, %v760
      %v762 = vand.u32 %v244, 4294901760
      %763 = vmatmul.f32.gmra.mxu0 %v762
      %v764 = vpop.f32.mrf.mxu0
      %v765 = vadd.f32 %v657, %v764
      %v766 = vand.u32 %v247, 4294901760
      %767 = vmatmul.f32.gmra.mxu0 %v766
      %v768 = vpop.f32.mrf.mxu0
      %v769 = vadd.f32 %v663, %v768
      %v770 = vand.u32 %v250, 4294901760
      %771 = vmatmul.f32.gmra.mxu0 %v770
      %v772 = vpop.f32.mrf.mxu0
      %v773 = vadd.f32 %v669, %v772
      %v774 = vand.u32 %v253, 4294901760
      %775 = vmatmul.f32.gmra.mxu0 %v774
      %v776 = vpop.f32.mrf.mxu0
      %v777 = vadd.f32 %v675, %v776
      %v778 = vand.u32 %v256, 4294901760
      %779 = vmatmul.f32.gmra.mxu0 %v778
      %v780 = vpop.f32.mrf.mxu0
      %v781 = vadd.f32 %v681, %v780
      %v782 = vand.u32 %v259, 4294901760
      %783 = vmatmul.f32.gmra.mxu0 %v782
      %v784 = vpop.f32.mrf.mxu0
      %v785 = vadd.f32 %v687, %v784
      %v786 = vand.u32 %v262, 4294901760
      %787 = vmatmul.f32.gmra.mxu0 %v786
      %v788 = vpop.f32.mrf.mxu0
      %v789 = vadd.f32 %v693, %v788
      %v790 = vand.u32 %v265, 4294901760
      %791 = vmatmul.f32.gmra.mxu0 %v790
      %v792 = vpop.f32.mrf.mxu0
      %v793 = vadd.f32 %v699, %v792
      %v794 = vand.u32 %v268, 4294901760
      %795 = vmatmul.f32.gmra.mxu0 %v794
      %v796 = vpop.f32.mrf.mxu0
      %v797 = vadd.f32 %v705, %v796
      %v798 = vand.u32 %v271, 4294901760
      %799 = vmatmul.f32.gmra.mxu0 %v798
      %v800 = vpop.f32.mrf.mxu0
      %v801 = vadd.f32 %v711, %v800
      %v802 = vand.u32 %v274, 4294901760
      %803 = vmatmul.f32.gmra.mxu0 %v802
      %v804 = vpop.f32.mrf.mxu0
      %v805 = vadd.f32 %v717, %v804
      %v806 = vand.u32 %v277, 4294901760
      %807 = vmatmul.f32.gmra.mxu0 %v806
      %v808 = vpop.f32.mrf.mxu0
      %v809 = vadd.f32 %v723, %v808
      %v810 = vand.u32 %v280, 4294901760
      %811 = vmatmul.f32.gmra.mxu0 %v810
      %v812 = vpop.f32.mrf.mxu0
      %v813 = vadd.f32 %v729, %v812
      %814 = vdwg.mxu0
      %815 = vmatpush.msra.mxu0 0.0
      %816 = vmatpush.msra.mxu0 0.0
      %817 = vmatpush.msra.mxu0 0.0
      %818 = vmatpush.msra.mxu0 0.0
      %819 = vmatpush.msra.mxu0 0.0
      %820 = vmatpush.msra.mxu0 0.0
      %821 = vmatpush.msra.mxu0 0.0
      %822 = vmatpush.msra.mxu0 0.0
      %823 = vmatpush.msra.mxu0 0.0
      %824 = vmatpush.msra.mxu0 0.0
      %825 = vmatpush.msra.mxu0 0.0
      %826 = vmatpush.msra.mxu0 0.0
      %827 = vmatpush.msra.mxu0 0.0
      %828 = vmatpush.msra.mxu0 0.0
      %829 = vmatpush.msra.mxu0 0.0
      %v830 = vand.u32 %v284, 4294901760
      %831 = vmatpush.msra.mxu0 %v830
      %v832 = vand.u32 %v235, 4294901760
      %833 = vmatmul.f32.gmra.mxu0 %v832
      %v834 = vpop.f32.mrf.mxu0
      %v835 = vadd.f32 %v753, %v834
      %v836 = vand.u32 %v238, 4294901760
      %837 = vmatmul.f32.gmra.mxu0 %v836
      %v838 = vpop.f32.mrf.mxu0
      %v839 = vadd.f32 %v757, %v838
      %v840 = vand.u32 %v241, 4294901760
      %841 = vmatmul.f32.gmra.mxu0 %v840
      %v842 = vpop.f32.mrf.mxu0
      %v843 = vadd.f32 %v761, %v842
      %v844 = vand.u32 %v244, 4294901760
      %845 = vmatmul.f32.gmra.mxu0 %v844
      %v846 = vpop.f32.mrf.mxu0
      %v847 = vadd.f32 %v765, %v846
      %v848 = vand.u32 %v247, 4294901760
      %849 = vmatmul.f32.gmra.mxu0 %v848
      %v850 = vpop.f32.mrf.mxu0
      %v851 = vadd.f32 %v769, %v850
      %v852 = vand.u32 %v250, 4294901760
      %853 = vmatmul.f32.gmra.mxu0 %v852
      %v854 = vpop.f32.mrf.mxu0
      %v855 = vadd.f32 %v773, %v854
      %v856 = vand.u32 %v253, 4294901760
      %857 = vmatmul.f32.gmra.mxu0 %v856
      %v858 = vpop.f32.mrf.mxu0
      %v859 = vadd.f32 %v777, %v858
      %v860 = vand.u32 %v256, 4294901760
      %861 = vmatmul.f32.gmra.mxu0 %v860
      %v862 = vpop.f32.mrf.mxu0
      %v863 = vadd.f32 %v781, %v862
      %v864 = vand.u32 %v259, 4294901760
      %865 = vmatmul.f32.gmra.mxu0 %v864
      %v866 = vpop.f32.mrf.mxu0
      %v867 = vadd.f32 %v785, %v866
      %v868 = vand.u32 %v262, 4294901760
      %869 = vmatmul.f32.gmra.mxu0 %v868
      %v870 = vpop.f32.mrf.mxu0
      %v871 = vadd.f32 %v789, %v870
      %v872 = vand.u32 %v265, 4294901760
      %873 = vmatmul.f32.gmra.mxu0 %v872
      %v874 = vpop.f32.mrf.mxu0
      %v875 = vadd.f32 %v793, %v874
      %v876 = vand.u32 %v268, 4294901760
      %877 = vmatmul.f32.gmra.mxu0 %v876
      %v878 = vpop.f32.mrf.mxu0
      %v879 = vadd.f32 %v797, %v878
      %v880 = vand.u32 %v271, 4294901760
      %881 = vmatmul.f32.gmra.mxu0 %v880
      %v882 = vpop.f32.mrf.mxu0
      %v883 = vadd.f32 %v801, %v882
      %v884 = vand.u32 %v274, 4294901760
      %885 = vmatmul.f32.gmra.mxu0 %v884
      %v886 = vpop.f32.mrf.mxu0
      %v887 = vadd.f32 %v805, %v886
      %v888 = vand.u32 %v277, 4294901760
      %889 = vmatmul.f32.gmra.mxu0 %v888
      %v890 = vpop.f32.mrf.mxu0
      %v891 = vadd.f32 %v809, %v890
      %v892 = vand.u32 %v280, 4294901760
      %893 = vmatmul.f32.gmra.mxu0 %v892
      %v894 = vpop.f32.mrf.mxu0
      %v895 = vadd.f32 %v813, %v894
      %896 = vdwg.mxu0
      %v898 = vsel %vm233, %v196, 0
      %v901 = vsel %vm233, %v197, 0
      %v904 = vsel %vm233, %v198, 0
      %v907 = vsel %vm233, %v199, 0
      %v910 = vsel %vm233, %v200, 0
      %v913 = vsel %vm233, %v201, 0
      %v916 = vsel %vm233, %v202, 0
      %v919 = vsel %vm233, %v203, 0
      %v922 = vsel %vm233, %v204, 0
      %v925 = vsel %vm233, %v205, 0
      %v928 = vsel %vm233, %v206, 0
      %v931 = vsel %vm233, %v207, 0
      %v934 = vsel %vm233, %v208, 0
      %v937 = vsel %vm233, %v209, 0
      %v940 = vsel %vm233, %v210, 0
      %v943 = vsel %vm233, %v211, 0
      %v946 = vsel %vm282, %v212, 0
      %948 = vmatpush.msra.mxu0 0.0
      %949 = vmatpush.msra.mxu0 0.0
      %950 = vmatpush.msra.mxu0 0.0
      %951 = vmatpush.msra.mxu0 0.0
      %952 = vmatpush.msra.mxu0 0.0
      %953 = vmatpush.msra.mxu0 0.0
      %954 = vmatpush.msra.mxu0 0.0
      %955 = vmatpush.msra.mxu0 0.0
      %956 = vmatpush.msra.mxu0 0.0
      %957 = vmatpush.msra.mxu0 0.0
      %958 = vmatpush.msra.mxu0 0.0
      %959 = vmatpush.msra.mxu0 0.0
      %960 = vmatpush.msra.mxu0 0.0
      %961 = vmatpush.msra.mxu0 0.0
      %962 = vmatpush.msra.mxu0 0.0
      %v963 = vand.u32 %v946, 4294901760
      %964 = vmatpush.msra.mxu0 %v963
      %v965 = vand.u32 %v898, 4294901760
      %v966 = vsub.f32 %v898, %v965
      %v967 = vand.u32 %v966, 4294901760
      %v968 = vsub.f32 %v966, %v967
      %v969 = vand.u32 %v968, 4294901760
      %970 = vmatmul.f32.gmra.mxu0 %v969
      %v971 = vpop.f32.mrf.mxu0
      %v972 = vadd.f32 %v835, %v971
      %v973 = vand.u32 %v901, 4294901760
      %v974 = vsub.f32 %v901, %v973
      %v975 = vand.u32 %v974, 4294901760
      %v976 = vsub.f32 %v974, %v975
      %v977 = vand.u32 %v976, 4294901760
      %978 = vmatmul.f32.gmra.mxu0 %v977
      %v979 = vpop.f32.mrf.mxu0
      %v980 = vadd.f32 %v839, %v979
      %v981 = vand.u32 %v904, 4294901760
      %v982 = vsub.f32 %v904, %v981
      %v983 = vand.u32 %v982, 4294901760
      %v984 = vsub.f32 %v982, %v983
      %v985 = vand.u32 %v984, 4294901760
      %986 = vmatmul.f32.gmra.mxu0 %v985
      %v987 = vpop.f32.mrf.mxu0
      %v988 = vadd.f32 %v843, %v987
      %v989 = vand.u32 %v907, 4294901760
      %v990 = vsub.f32 %v907, %v989
      %v991 = vand.u32 %v990, 4294901760
      %v992 = vsub.f32 %v990, %v991
      %v993 = vand.u32 %v992, 4294901760
      %994 = vmatmul.f32.gmra.mxu0 %v993
      %v995 = vpop.f32.mrf.mxu0
      %v996 = vadd.f32 %v847, %v995
      %v997 = vand.u32 %v910, 4294901760
      %v998 = vsub.f32 %v910, %v997
      %v999 = vand.u32 %v998, 4294901760
      %v1000 = vsub.f32 %v998, %v999
      %v1001 = vand.u32 %v1000, 4294901760
      %1002 = vmatmul.f32.gmra.mxu0 %v1001
      %v1003 = vpop.f32.mrf.mxu0
      %v1004 = vadd.f32 %v851, %v1003
      %v1005 = vand.u32 %v913, 4294901760
      %v1006 = vsub.f32 %v913, %v1005
      %v1007 = vand.u32 %v1006, 4294901760
      %v1008 = vsub.f32 %v1006, %v1007
      %v1009 = vand.u32 %v1008, 4294901760
      %1010 = vmatmul.f32.gmra.mxu0 %v1009
      %v1011 = vpop.f32.mrf.mxu0
      %v1012 = vadd.f32 %v855, %v1011
      %v1013 = vand.u32 %v916, 4294901760
      %v1014 = vsub.f32 %v916, %v1013
      %v1015 = vand.u32 %v1014, 4294901760
      %v1016 = vsub.f32 %v1014, %v1015
      %v1017 = vand.u32 %v1016, 4294901760
      %1018 = vmatmul.f32.gmra.mxu0 %v1017
      %v1019 = vpop.f32.mrf.mxu0
      %v1020 = vadd.f32 %v859, %v1019
      %v1021 = vand.u32 %v919, 4294901760
      %v1022 = vsub.f32 %v919, %v1021
      %v1023 = vand.u32 %v1022, 4294901760
      %v1024 = vsub.f32 %v1022, %v1023
      %v1025 = vand.u32 %v1024, 4294901760
      %1026 = vmatmul.f32.gmra.mxu0 %v1025
      %v1027 = vpop.f32.mrf.mxu0
      %v1028 = vadd.f32 %v863, %v1027
      %v1029 = vand.u32 %v922, 4294901760
      %v1030 = vsub.f32 %v922, %v1029
      %v1031 = vand.u32 %v1030, 4294901760
      %v1032 = vsub.f32 %v1030, %v1031
      %v1033 = vand.u32 %v1032, 4294901760
      %1034 = vmatmul.f32.gmra.mxu0 %v1033
      %v1035 = vpop.f32.mrf.mxu0
      %v1036 = vadd.f32 %v867, %v1035
      %v1037 = vand.u32 %v925, 4294901760
      %v1038 = vsub.f32 %v925, %v1037
      %v1039 = vand.u32 %v1038, 4294901760
      %v1040 = vsub.f32 %v1038, %v1039
      %v1041 = vand.u32 %v1040, 4294901760
      %1042 = vmatmul.f32.gmra.mxu0 %v1041
      %v1043 = vpop.f32.mrf.mxu0
      %v1044 = vadd.f32 %v871, %v1043
      %v1045 = vand.u32 %v928, 4294901760
      %v1046 = vsub.f32 %v928, %v1045
      %v1047 = vand.u32 %v1046, 4294901760
      %v1048 = vsub.f32 %v1046, %v1047
      %v1049 = vand.u32 %v1048, 4294901760
      %1050 = vmatmul.f32.gmra.mxu0 %v1049
      %v1051 = vpop.f32.mrf.mxu0
      %v1052 = vadd.f32 %v875, %v1051
      %v1053 = vand.u32 %v931, 4294901760
      %v1054 = vsub.f32 %v931, %v1053
      %v1055 = vand.u32 %v1054, 4294901760
      %v1056 = vsub.f32 %v1054, %v1055
      %v1057 = vand.u32 %v1056, 4294901760
      %1058 = vmatmul.f32.gmra.mxu0 %v1057
      %v1059 = vpop.f32.mrf.mxu0
      %v1060 = vadd.f32 %v879, %v1059
      %v1061 = vand.u32 %v934, 4294901760
      %v1062 = vsub.f32 %v934, %v1061
      %v1063 = vand.u32 %v1062, 4294901760
      %v1064 = vsub.f32 %v1062, %v1063
      %v1065 = vand.u32 %v1064, 4294901760
      %1066 = vmatmul.f32.gmra.mxu0 %v1065
      %v1067 = vpop.f32.mrf.mxu0
      %v1068 = vadd.f32 %v883, %v1067
      %v1069 = vand.u32 %v937, 4294901760
      %v1070 = vsub.f32 %v937, %v1069
      %v1071 = vand.u32 %v1070, 4294901760
      %v1072 = vsub.f32 %v1070, %v1071
      %v1073 = vand.u32 %v1072, 4294901760
      %1074 = vmatmul.f32.gmra.mxu0 %v1073
      %v1075 = vpop.f32.mrf.mxu0
      %v1076 = vadd.f32 %v887, %v1075
      %v1077 = vand.u32 %v940, 4294901760
      %v1078 = vsub.f32 %v940, %v1077
      %v1079 = vand.u32 %v1078, 4294901760
      %v1080 = vsub.f32 %v1078, %v1079
      %v1081 = vand.u32 %v1080, 4294901760
      %1082 = vmatmul.f32.gmra.mxu0 %v1081
      %v1083 = vpop.f32.mrf.mxu0
      %v1084 = vadd.f32 %v891, %v1083
      %v1085 = vand.u32 %v943, 4294901760
      %v1086 = vsub.f32 %v943, %v1085
      %v1087 = vand.u32 %v1086, 4294901760
      %v1088 = vsub.f32 %v1086, %v1087
      %v1089 = vand.u32 %v1088, 4294901760
      %1090 = vmatmul.f32.gmra.mxu0 %v1089
      %v1091 = vpop.f32.mrf.mxu0
      %v1092 = vadd.f32 %v895, %v1091
      %1093 = vdwg.mxu0
      %1094 = vmatpush.msra.mxu0 0.0
      %1095 = vmatpush.msra.mxu0 0.0
      %1096 = vmatpush.msra.mxu0 0.0
      %1097 = vmatpush.msra.mxu0 0.0
      %1098 = vmatpush.msra.mxu0 0.0
      %1099 = vmatpush.msra.mxu0 0.0
      %1100 = vmatpush.msra.mxu0 0.0
      %1101 = vmatpush.msra.mxu0 0.0
      %1102 = vmatpush.msra.mxu0 0.0
      %1103 = vmatpush.msra.mxu0 0.0
      %1104 = vmatpush.msra.mxu0 0.0
      %1105 = vmatpush.msra.mxu0 0.0
      %1106 = vmatpush.msra.mxu0 0.0
      %1107 = vmatpush.msra.mxu0 0.0
      %1108 = vmatpush.msra.mxu0 0.0
      %v1109 = vand.u32 %v946, 4294901760
      %v1110 = vsub.f32 %v946, %v1109
      %v1111 = vand.u32 %v1110, 4294901760
      %v1112 = vsub.f32 %v1110, %v1111
      %v1113 = vand.u32 %v1112, 4294901760
      %1114 = vmatpush.msra.mxu0 %v1113
      %v1115 = vand.u32 %v898, 4294901760
      %1116 = vmatmul.f32.gmra.mxu0 %v1115
      %v1117 = vpop.f32.mrf.mxu0
      %v1118 = vadd.f32 %v972, %v1117
      %v1119 = vand.u32 %v901, 4294901760
      %1120 = vmatmul.f32.gmra.mxu0 %v1119
      %v1121 = vpop.f32.mrf.mxu0
      %v1122 = vadd.f32 %v980, %v1121
      %v1123 = vand.u32 %v904, 4294901760
      %1124 = vmatmul.f32.gmra.mxu0 %v1123
      %v1125 = vpop.f32.mrf.mxu0
      %v1126 = vadd.f32 %v988, %v1125
      %v1127 = vand.u32 %v907, 4294901760
      %1128 = vmatmul.f32.gmra.mxu0 %v1127
      %v1129 = vpop.f32.mrf.mxu0
      %v1130 = vadd.f32 %v996, %v1129
      %v1131 = vand.u32 %v910, 4294901760
      %1132 = vmatmul.f32.gmra.mxu0 %v1131
      %v1133 = vpop.f32.mrf.mxu0
      %v1134 = vadd.f32 %v1004, %v1133
      %v1135 = vand.u32 %v913, 4294901760
      %1136 = vmatmul.f32.gmra.mxu0 %v1135
      %v1137 = vpop.f32.mrf.mxu0
      %v1138 = vadd.f32 %v1012, %v1137
      %v1139 = vand.u32 %v916, 4294901760
      %1140 = vmatmul.f32.gmra.mxu0 %v1139
      %v1141 = vpop.f32.mrf.mxu0
      %v1142 = vadd.f32 %v1020, %v1141
      %v1143 = vand.u32 %v919, 4294901760
      %1144 = vmatmul.f32.gmra.mxu0 %v1143
      %v1145 = vpop.f32.mrf.mxu0
      %v1146 = vadd.f32 %v1028, %v1145
      %v1147 = vand.u32 %v922, 4294901760
      %1148 = vmatmul.f32.gmra.mxu0 %v1147
      %v1149 = vpop.f32.mrf.mxu0
      %v1150 = vadd.f32 %v1036, %v1149
      %v1151 = vand.u32 %v925, 4294901760
      %1152 = vmatmul.f32.gmra.mxu0 %v1151
      %v1153 = vpop.f32.mrf.mxu0
      %v1154 = vadd.f32 %v1044, %v1153
      %v1155 = vand.u32 %v928, 4294901760
      %1156 = vmatmul.f32.gmra.mxu0 %v1155
      %v1157 = vpop.f32.mrf.mxu0
      %v1158 = vadd.f32 %v1052, %v1157
      %v1159 = vand.u32 %v931, 4294901760
      %1160 = vmatmul.f32.gmra.mxu0 %v1159
      %v1161 = vpop.f32.mrf.mxu0
      %v1162 = vadd.f32 %v1060, %v1161
      %v1163 = vand.u32 %v934, 4294901760
      %1164 = vmatmul.f32.gmra.mxu0 %v1163
      %v1165 = vpop.f32.mrf.mxu0
      %v1166 = vadd.f32 %v1068, %v1165
      %v1167 = vand.u32 %v937, 4294901760
      %1168 = vmatmul.f32.gmra.mxu0 %v1167
      %v1169 = vpop.f32.mrf.mxu0
      %v1170 = vadd.f32 %v1076, %v1169
      %v1171 = vand.u32 %v940, 4294901760
      %1172 = vmatmul.f32.gmra.mxu0 %v1171
      %v1173 = vpop.f32.mrf.mxu0
      %v1174 = vadd.f32 %v1084, %v1173
      %v1175 = vand.u32 %v943, 4294901760
      %1176 = vmatmul.f32.gmra.mxu0 %v1175
      %v1177 = vpop.f32.mrf.mxu0
      %v1178 = vadd.f32 %v1092, %v1177
      %1179 = vdwg.mxu0
      %1180 = vmatpush.msra.mxu0 0.0
      %1181 = vmatpush.msra.mxu0 0.0
      %1182 = vmatpush.msra.mxu0 0.0
      %1183 = vmatpush.msra.mxu0 0.0
      %1184 = vmatpush.msra.mxu0 0.0
      %1185 = vmatpush.msra.mxu0 0.0
      %1186 = vmatpush.msra.mxu0 0.0
      %1187 = vmatpush.msra.mxu0 0.0
      %1188 = vmatpush.msra.mxu0 0.0
      %1189 = vmatpush.msra.mxu0 0.0
      %1190 = vmatpush.msra.mxu0 0.0
      %1191 = vmatpush.msra.mxu0 0.0
      %1192 = vmatpush.msra.mxu0 0.0
      %1193 = vmatpush.msra.mxu0 0.0
      %1194 = vmatpush.msra.mxu0 0.0
      %v1195 = vand.u32 %v946, 4294901760
      %v1196 = vsub.f32 %v946, %v1195
      %1197 = vmatpush.msra.mxu0 %v1196
      %v1198 = vand.u32 %v898, 4294901760
      %v1199 = vsub.f32 %v898, %v1198
      %1200 = vmatmul.f32.gmra.mxu0 %v1199
      %v1201 = vpop.f32.mrf.mxu0
      %v1202 = vadd.f32 %v1118, %v1201
      %v1203 = vand.u32 %v901, 4294901760
      %v1204 = vsub.f32 %v901, %v1203
      %1205 = vmatmul.f32.gmra.mxu0 %v1204
      %v1206 = vpop.f32.mrf.mxu0
      %v1207 = vadd.f32 %v1122, %v1206
      %v1208 = vand.u32 %v904, 4294901760
      %v1209 = vsub.f32 %v904, %v1208
      %1210 = vmatmul.f32.gmra.mxu0 %v1209
      %v1211 = vpop.f32.mrf.mxu0
      %v1212 = vadd.f32 %v1126, %v1211
      %v1213 = vand.u32 %v907, 4294901760
      %v1214 = vsub.f32 %v907, %v1213
      %1215 = vmatmul.f32.gmra.mxu0 %v1214
      %v1216 = vpop.f32.mrf.mxu0
      %v1217 = vadd.f32 %v1130, %v1216
      %v1218 = vand.u32 %v910, 4294901760
      %v1219 = vsub.f32 %v910, %v1218
      %1220 = vmatmul.f32.gmra.mxu0 %v1219
      %v1221 = vpop.f32.mrf.mxu0
      %v1222 = vadd.f32 %v1134, %v1221
      %v1223 = vand.u32 %v913, 4294901760
      %v1224 = vsub.f32 %v913, %v1223
      %1225 = vmatmul.f32.gmra.mxu0 %v1224
      %v1226 = vpop.f32.mrf.mxu0
      %v1227 = vadd.f32 %v1138, %v1226
      %v1228 = vand.u32 %v916, 4294901760
      %v1229 = vsub.f32 %v916, %v1228
      %1230 = vmatmul.f32.gmra.mxu0 %v1229
      %v1231 = vpop.f32.mrf.mxu0
      %v1232 = vadd.f32 %v1142, %v1231
      %v1233 = vand.u32 %v919, 4294901760
      %v1234 = vsub.f32 %v919, %v1233
      %1235 = vmatmul.f32.gmra.mxu0 %v1234
      %v1236 = vpop.f32.mrf.mxu0
      %v1237 = vadd.f32 %v1146, %v1236
      %v1238 = vand.u32 %v922, 4294901760
      %v1239 = vsub.f32 %v922, %v1238
      %1240 = vmatmul.f32.gmra.mxu0 %v1239
      %v1241 = vpop.f32.mrf.mxu0
      %v1242 = vadd.f32 %v1150, %v1241
      %v1243 = vand.u32 %v925, 4294901760
      %v1244 = vsub.f32 %v925, %v1243
      %1245 = vmatmul.f32.gmra.mxu0 %v1244
      %v1246 = vpop.f32.mrf.mxu0
      %v1247 = vadd.f32 %v1154, %v1246
      %v1248 = vand.u32 %v928, 4294901760
      %v1249 = vsub.f32 %v928, %v1248
      %1250 = vmatmul.f32.gmra.mxu0 %v1249
      %v1251 = vpop.f32.mrf.mxu0
      %v1252 = vadd.f32 %v1158, %v1251
      %v1253 = vand.u32 %v931, 4294901760
      %v1254 = vsub.f32 %v931, %v1253
      %1255 = vmatmul.f32.gmra.mxu0 %v1254
      %v1256 = vpop.f32.mrf.mxu0
      %v1257 = vadd.f32 %v1162, %v1256
      %v1258 = vand.u32 %v934, 4294901760
      %v1259 = vsub.f32 %v934, %v1258
      %1260 = vmatmul.f32.gmra.mxu0 %v1259
      %v1261 = vpop.f32.mrf.mxu0
      %v1262 = vadd.f32 %v1166, %v1261
      %v1263 = vand.u32 %v937, 4294901760
      %v1264 = vsub.f32 %v937, %v1263
      %1265 = vmatmul.f32.gmra.mxu0 %v1264
      %v1266 = vpop.f32.mrf.mxu0
      %v1267 = vadd.f32 %v1170, %v1266
      %v1268 = vand.u32 %v940, 4294901760
      %v1269 = vsub.f32 %v940, %v1268
      %1270 = vmatmul.f32.gmra.mxu0 %v1269
      %v1271 = vpop.f32.mrf.mxu0
      %v1272 = vadd.f32 %v1174, %v1271
      %v1273 = vand.u32 %v943, 4294901760
      %v1274 = vsub.f32 %v943, %v1273
      %1275 = vmatmul.f32.gmra.mxu0 %v1274
      %v1276 = vpop.f32.mrf.mxu0
      %v1277 = vadd.f32 %v1178, %v1276
      %1278 = vdwg.mxu0
      %1279 = vmatpush.msra.mxu0 0.0
      %1280 = vmatpush.msra.mxu0 0.0
      %1281 = vmatpush.msra.mxu0 0.0
      %1282 = vmatpush.msra.mxu0 0.0
      %1283 = vmatpush.msra.mxu0 0.0
      %1284 = vmatpush.msra.mxu0 0.0
      %1285 = vmatpush.msra.mxu0 0.0
      %1286 = vmatpush.msra.mxu0 0.0
      %1287 = vmatpush.msra.mxu0 0.0
      %1288 = vmatpush.msra.mxu0 0.0
      %1289 = vmatpush.msra.mxu0 0.0
      %1290 = vmatpush.msra.mxu0 0.0
      %1291 = vmatpush.msra.mxu0 0.0
      %1292 = vmatpush.msra.mxu0 0.0
      %1293 = vmatpush.msra.mxu0 0.0
      %v1294 = vand.u32 %v946, 4294901760
      %1295 = vmatpush.msra.mxu0 %v1294
      %v1296 = vand.u32 %v898, 4294901760
      %v1297 = vsub.f32 %v898, %v1296
      %v1298 = vand.u32 %v1297, 4294901760
      %1299 = vmatmul.f32.gmra.mxu0 %v1298
      %v1300 = vpop.f32.mrf.mxu0
      %v1301 = vadd.f32 %v1202, %v1300
      %v1302 = vand.u32 %v901, 4294901760
      %v1303 = vsub.f32 %v901, %v1302
      %v1304 = vand.u32 %v1303, 4294901760
      %1305 = vmatmul.f32.gmra.mxu0 %v1304
      %v1306 = vpop.f32.mrf.mxu0
      %v1307 = vadd.f32 %v1207, %v1306
      %v1308 = vand.u32 %v904, 4294901760
      %v1309 = vsub.f32 %v904, %v1308
      %v1310 = vand.u32 %v1309, 4294901760
      %1311 = vmatmul.f32.gmra.mxu0 %v1310
      %v1312 = vpop.f32.mrf.mxu0
      %v1313 = vadd.f32 %v1212, %v1312
      %v1314 = vand.u32 %v907, 4294901760
      %v1315 = vsub.f32 %v907, %v1314
      %v1316 = vand.u32 %v1315, 4294901760
      %1317 = vmatmul.f32.gmra.mxu0 %v1316
      %v1318 = vpop.f32.mrf.mxu0
      %v1319 = vadd.f32 %v1217, %v1318
      %v1320 = vand.u32 %v910, 4294901760
      %v1321 = vsub.f32 %v910, %v1320
      %v1322 = vand.u32 %v1321, 4294901760
      %1323 = vmatmul.f32.gmra.mxu0 %v1322
      %v1324 = vpop.f32.mrf.mxu0
      %v1325 = vadd.f32 %v1222, %v1324
      %v1326 = vand.u32 %v913, 4294901760
      %v1327 = vsub.f32 %v913, %v1326
      %v1328 = vand.u32 %v1327, 4294901760
      %1329 = vmatmul.f32.gmra.mxu0 %v1328
      %v1330 = vpop.f32.mrf.mxu0
      %v1331 = vadd.f32 %v1227, %v1330
      %v1332 = vand.u32 %v916, 4294901760
      %v1333 = vsub.f32 %v916, %v1332
      %v1334 = vand.u32 %v1333, 4294901760
      %1335 = vmatmul.f32.gmra.mxu0 %v1334
      %v1336 = vpop.f32.mrf.mxu0
      %v1337 = vadd.f32 %v1232, %v1336
      %v1338 = vand.u32 %v919, 4294901760
      %v1339 = vsub.f32 %v919, %v1338
      %v1340 = vand.u32 %v1339, 4294901760
      %1341 = vmatmul.f32.gmra.mxu0 %v1340
      %v1342 = vpop.f32.mrf.mxu0
      %v1343 = vadd.f32 %v1237, %v1342
      %v1344 = vand.u32 %v922, 4294901760
      %v1345 = vsub.f32 %v922, %v1344
      %v1346 = vand.u32 %v1345, 4294901760
      %1347 = vmatmul.f32.gmra.mxu0 %v1346
      %v1348 = vpop.f32.mrf.mxu0
      %v1349 = vadd.f32 %v1242, %v1348
      %v1350 = vand.u32 %v925, 4294901760
      %v1351 = vsub.f32 %v925, %v1350
      %v1352 = vand.u32 %v1351, 4294901760
      %1353 = vmatmul.f32.gmra.mxu0 %v1352
      %v1354 = vpop.f32.mrf.mxu0
      %v1355 = vadd.f32 %v1247, %v1354
      %v1356 = vand.u32 %v928, 4294901760
      %v1357 = vsub.f32 %v928, %v1356
      %v1358 = vand.u32 %v1357, 4294901760
      %1359 = vmatmul.f32.gmra.mxu0 %v1358
      %v1360 = vpop.f32.mrf.mxu0
      %v1361 = vadd.f32 %v1252, %v1360
      %v1362 = vand.u32 %v931, 4294901760
      %v1363 = vsub.f32 %v931, %v1362
      %v1364 = vand.u32 %v1363, 4294901760
      %1365 = vmatmul.f32.gmra.mxu0 %v1364
      %v1366 = vpop.f32.mrf.mxu0
      %v1367 = vadd.f32 %v1257, %v1366
      %v1368 = vand.u32 %v934, 4294901760
      %v1369 = vsub.f32 %v934, %v1368
      %v1370 = vand.u32 %v1369, 4294901760
      %1371 = vmatmul.f32.gmra.mxu0 %v1370
      %v1372 = vpop.f32.mrf.mxu0
      %v1373 = vadd.f32 %v1262, %v1372
      %v1374 = vand.u32 %v937, 4294901760
      %v1375 = vsub.f32 %v937, %v1374
      %v1376 = vand.u32 %v1375, 4294901760
      %1377 = vmatmul.f32.gmra.mxu0 %v1376
      %v1378 = vpop.f32.mrf.mxu0
      %v1379 = vadd.f32 %v1267, %v1378
      %v1380 = vand.u32 %v940, 4294901760
      %v1381 = vsub.f32 %v940, %v1380
      %v1382 = vand.u32 %v1381, 4294901760
      %1383 = vmatmul.f32.gmra.mxu0 %v1382
      %v1384 = vpop.f32.mrf.mxu0
      %v1385 = vadd.f32 %v1272, %v1384
      %v1386 = vand.u32 %v943, 4294901760
      %v1387 = vsub.f32 %v943, %v1386
      %v1388 = vand.u32 %v1387, 4294901760
      %1389 = vmatmul.f32.gmra.mxu0 %v1388
      %v1390 = vpop.f32.mrf.mxu0
      %v1391 = vadd.f32 %v1277, %v1390
      %1392 = vdwg.mxu0
      %1393 = vmatpush.msra.mxu0 0.0
      %1394 = vmatpush.msra.mxu0 0.0
      %1395 = vmatpush.msra.mxu0 0.0
      %1396 = vmatpush.msra.mxu0 0.0
      %1397 = vmatpush.msra.mxu0 0.0
      %1398 = vmatpush.msra.mxu0 0.0
      %1399 = vmatpush.msra.mxu0 0.0
      %1400 = vmatpush.msra.mxu0 0.0
      %1401 = vmatpush.msra.mxu0 0.0
      %1402 = vmatpush.msra.mxu0 0.0
      %1403 = vmatpush.msra.mxu0 0.0
      %1404 = vmatpush.msra.mxu0 0.0
      %1405 = vmatpush.msra.mxu0 0.0
      %1406 = vmatpush.msra.mxu0 0.0
      %1407 = vmatpush.msra.mxu0 0.0
      %v1408 = vand.u32 %v946, 4294901760
      %v1409 = vsub.f32 %v946, %v1408
      %v1410 = vand.u32 %v1409, 4294901760
      %1411 = vmatpush.msra.mxu0 %v1410
      %v1412 = vand.u32 %v898, 4294901760
      %1413 = vmatmul.f32.gmra.mxu0 %v1412
      %v1414 = vpop.f32.mrf.mxu0
      %v1415 = vadd.f32 %v1301, %v1414
      %v1416 = vand.u32 %v901, 4294901760
      %1417 = vmatmul.f32.gmra.mxu0 %v1416
      %v1418 = vpop.f32.mrf.mxu0
      %v1419 = vadd.f32 %v1307, %v1418
      %v1420 = vand.u32 %v904, 4294901760
      %1421 = vmatmul.f32.gmra.mxu0 %v1420
      %v1422 = vpop.f32.mrf.mxu0
      %v1423 = vadd.f32 %v1313, %v1422
      %v1424 = vand.u32 %v907, 4294901760
      %1425 = vmatmul.f32.gmra.mxu0 %v1424
      %v1426 = vpop.f32.mrf.mxu0
      %v1427 = vadd.f32 %v1319, %v1426
      %v1428 = vand.u32 %v910, 4294901760
      %1429 = vmatmul.f32.gmra.mxu0 %v1428
      %v1430 = vpop.f32.mrf.mxu0
      %v1431 = vadd.f32 %v1325, %v1430
      %v1432 = vand.u32 %v913, 4294901760
      %1433 = vmatmul.f32.gmra.mxu0 %v1432
      %v1434 = vpop.f32.mrf.mxu0
      %v1435 = vadd.f32 %v1331, %v1434
      %v1436 = vand.u32 %v916, 4294901760
      %1437 = vmatmul.f32.gmra.mxu0 %v1436
      %v1438 = vpop.f32.mrf.mxu0
      %v1439 = vadd.f32 %v1337, %v1438
      %v1440 = vand.u32 %v919, 4294901760
      %1441 = vmatmul.f32.gmra.mxu0 %v1440
      %v1442 = vpop.f32.mrf.mxu0
      %v1443 = vadd.f32 %v1343, %v1442
      %v1444 = vand.u32 %v922, 4294901760
      %1445 = vmatmul.f32.gmra.mxu0 %v1444
      %v1446 = vpop.f32.mrf.mxu0
      %v1447 = vadd.f32 %v1349, %v1446
      %v1448 = vand.u32 %v925, 4294901760
      %1449 = vmatmul.f32.gmra.mxu0 %v1448
      %v1450 = vpop.f32.mrf.mxu0
      %v1451 = vadd.f32 %v1355, %v1450
      %v1452 = vand.u32 %v928, 4294901760
      %1453 = vmatmul.f32.gmra.mxu0 %v1452
      %v1454 = vpop.f32.mrf.mxu0
      %v1455 = vadd.f32 %v1361, %v1454
      %v1456 = vand.u32 %v931, 4294901760
      %1457 = vmatmul.f32.gmra.mxu0 %v1456
      %v1458 = vpop.f32.mrf.mxu0
      %v1459 = vadd.f32 %v1367, %v1458
      %v1460 = vand.u32 %v934, 4294901760
      %1461 = vmatmul.f32.gmra.mxu0 %v1460
      %v1462 = vpop.f32.mrf.mxu0
      %v1463 = vadd.f32 %v1373, %v1462
      %v1464 = vand.u32 %v937, 4294901760
      %1465 = vmatmul.f32.gmra.mxu0 %v1464
      %v1466 = vpop.f32.mrf.mxu0
      %v1467 = vadd.f32 %v1379, %v1466
      %v1468 = vand.u32 %v940, 4294901760
      %1469 = vmatmul.f32.gmra.mxu0 %v1468
      %v1470 = vpop.f32.mrf.mxu0
      %v1471 = vadd.f32 %v1385, %v1470
      %v1472 = vand.u32 %v943, 4294901760
      %1473 = vmatmul.f32.gmra.mxu0 %v1472
      %v1474 = vpop.f32.mrf.mxu0
      %v1475 = vadd.f32 %v1391, %v1474
      %1476 = vdwg.mxu0
      %1477 = vmatpush.msra.mxu0 0.0
      %1478 = vmatpush.msra.mxu0 0.0
      %1479 = vmatpush.msra.mxu0 0.0
      %1480 = vmatpush.msra.mxu0 0.0
      %1481 = vmatpush.msra.mxu0 0.0
      %1482 = vmatpush.msra.mxu0 0.0
      %1483 = vmatpush.msra.mxu0 0.0
      %1484 = vmatpush.msra.mxu0 0.0
      %1485 = vmatpush.msra.mxu0 0.0
      %1486 = vmatpush.msra.mxu0 0.0
      %1487 = vmatpush.msra.mxu0 0.0
      %1488 = vmatpush.msra.mxu0 0.0
      %1489 = vmatpush.msra.mxu0 0.0
      %1490 = vmatpush.msra.mxu0 0.0
      %1491 = vmatpush.msra.mxu0 0.0
      %v1492 = vand.u32 %v946, 4294901760
      %1493 = vmatpush.msra.mxu0 %v1492
      %v1494 = vand.u32 %v898, 4294901760
      %1495 = vmatmul.f32.gmra.mxu0 %v1494
      %v1496 = vpop.f32.mrf.mxu0
      %v1497 = vadd.f32 %v1415, %v1496
      %v1498 = vand.u32 %v901, 4294901760
      %1499 = vmatmul.f32.gmra.mxu0 %v1498
      %v1500 = vpop.f32.mrf.mxu0
      %v1501 = vadd.f32 %v1419, %v1500
      %v1502 = vand.u32 %v904, 4294901760
      %1503 = vmatmul.f32.gmra.mxu0 %v1502
      %v1504 = vpop.f32.mrf.mxu0
      %v1505 = vadd.f32 %v1423, %v1504
      %v1506 = vand.u32 %v907, 4294901760
      %1507 = vmatmul.f32.gmra.mxu0 %v1506
      %v1508 = vpop.f32.mrf.mxu0
      %v1509 = vadd.f32 %v1427, %v1508
      %v1510 = vand.u32 %v910, 4294901760
      %1511 = vmatmul.f32.gmra.mxu0 %v1510
      %v1512 = vpop.f32.mrf.mxu0
      %v1513 = vadd.f32 %v1431, %v1512
      %v1514 = vand.u32 %v913, 4294901760
      %1515 = vmatmul.f32.gmra.mxu0 %v1514
      %v1516 = vpop.f32.mrf.mxu0
      %v1517 = vadd.f32 %v1435, %v1516
      %v1518 = vand.u32 %v916, 4294901760
      %1519 = vmatmul.f32.gmra.mxu0 %v1518
      %v1520 = vpop.f32.mrf.mxu0
      %v1521 = vadd.f32 %v1439, %v1520
      %v1522 = vand.u32 %v919, 4294901760
      %1523 = vmatmul.f32.gmra.mxu0 %v1522
      %v1524 = vpop.f32.mrf.mxu0
      %v1525 = vadd.f32 %v1443, %v1524
      %v1526 = vand.u32 %v922, 4294901760
      %1527 = vmatmul.f32.gmra.mxu0 %v1526
      %v1528 = vpop.f32.mrf.mxu0
      %v1529 = vadd.f32 %v1447, %v1528
      %v1530 = vand.u32 %v925, 4294901760
      %1531 = vmatmul.f32.gmra.mxu0 %v1530
      %v1532 = vpop.f32.mrf.mxu0
      %v1533 = vadd.f32 %v1451, %v1532
      %v1534 = vand.u32 %v928, 4294901760
      %1535 = vmatmul.f32.gmra.mxu0 %v1534
      %v1536 = vpop.f32.mrf.mxu0
      %v1537 = vadd.f32 %v1455, %v1536
      %v1538 = vand.u32 %v931, 4294901760
      %1539 = vmatmul.f32.gmra.mxu0 %v1538
      %v1540 = vpop.f32.mrf.mxu0
      %v1541 = vadd.f32 %v1459, %v1540
      %v1542 = vand.u32 %v934, 4294901760
      %1543 = vmatmul.f32.gmra.mxu0 %v1542
      %v1544 = vpop.f32.mrf.mxu0
      %v1545 = vadd.f32 %v1463, %v1544
      %v1546 = vand.u32 %v937, 4294901760
      %1547 = vmatmul.f32.gmra.mxu0 %v1546
      %v1548 = vpop.f32.mrf.mxu0
      %v1549 = vadd.f32 %v1467, %v1548
      %v1550 = vand.u32 %v940, 4294901760
      %1551 = vmatmul.f32.gmra.mxu0 %v1550
      %v1552 = vpop.f32.mrf.mxu0
      %v1553 = vadd.f32 %v1471, %v1552
      %v1554 = vand.u32 %v943, 4294901760
      %1555 = vmatmul.f32.gmra.mxu0 %v1554
      %v1556 = vpop.f32.mrf.mxu0
      %v1557 = vadd.f32 %v1475, %v1556
      %1558 = vdwg.mxu0
      %s1559 = sadd.s32 %s194, 32
      %s1560 = scalar_lea.vmem %s183, %s1559
      %v1561 = vld [vmem:[%s1560] sm:$0xff]
      %v1562 = vld [vmem:[%s1560 + $0x8] sm:$0xff]
      %v1563 = vld [vmem:[%s1560 + $0x10] sm:$0xff]
      %v1564 = vld [vmem:[%s1560 + $0x18] sm:$0xff]
      %v1565 = vld [vmem:[%s1560 + $0x20] sm:$0xff]
      %v1566 = vld [vmem:[%s1560 + $0x28] sm:$0xff]
      %v1567 = vld [vmem:[%s1560 + $0x30] sm:$0xff]
      %v1568 = vld [vmem:[%s1560 + $0x38] sm:$0xff]
      %v1569 = vld [vmem:[%s1560 + $0x40] sm:$0xff]
      %v1570 = vld [vmem:[%s1560 + $0x48] sm:$0xff]
      %v1571 = vld [vmem:[%s1560 + $0x50] sm:$0xff]
      %v1572 = vld [vmem:[%s1560 + $0x58] sm:$0xff]
      %v1573 = vld [vmem:[%s1560 + $0x60] sm:$0xff]
      %v1574 = vld [vmem:[%s1560 + $0x68] sm:$0xff]
      %v1575 = vld [vmem:[%s1560 + $0x70] sm:$0xff]
      %v1576 = vld [vmem:[%s1560 + $0x78] sm:$0xff]
      %s1577 = scalar_lea.vmem %s1, 8
      %v1578 = vld [vmem:[%s1577] sm:$0xf]
      %v1580 = vsel %vm233, %v1561, 0
      %v1583 = vsel %vm233, %v1562, 0
      %v1586 = vsel %vm233, %v1563, 0
      %v1589 = vsel %vm233, %v1564, 0
      %v1592 = vsel %vm233, %v1565, 0
      %v1595 = vsel %vm233, %v1566, 0
      %v1598 = vsel %vm233, %v1567, 0
      %v1601 = vsel %vm233, %v1568, 0
      %v1604 = vsel %vm233, %v1569, 0
      %v1607 = vsel %vm233, %v1570, 0
      %v1610 = vsel %vm233, %v1571, 0
      %v1613 = vsel %vm233, %v1572, 0
      %v1616 = vsel %vm233, %v1573, 0
      %v1619 = vsel %vm233, %v1574, 0
      %v1622 = vsel %vm233, %v1575, 0
      %v1625 = vsel %vm233, %v1576, 0
      %v1628 = vsel %vm282, %v1578, 0
      %1630 = vmatpush.msra.mxu0 0.0
      %1631 = vmatpush.msra.mxu0 0.0
      %1632 = vmatpush.msra.mxu0 0.0
      %1633 = vmatpush.msra.mxu0 0.0
      %1634 = vmatpush.msra.mxu0 0.0
      %1635 = vmatpush.msra.mxu0 0.0
      %1636 = vmatpush.msra.mxu0 0.0
      %1637 = vmatpush.msra.mxu0 0.0
      %1638 = vmatpush.msra.mxu0 0.0
      %1639 = vmatpush.msra.mxu0 0.0
      %1640 = vmatpush.msra.mxu0 0.0
      %1641 = vmatpush.msra.mxu0 0.0
      %1642 = vmatpush.msra.mxu0 0.0
      %1643 = vmatpush.msra.mxu0 0.0
      %1644 = vmatpush.msra.mxu0 0.0
      %v1645 = vand.u32 %v1628, 4294901760
      %1646 = vmatpush.msra.mxu0 %v1645
      %v1647 = vand.u32 %v1580, 4294901760
      %v1648 = vsub.f32 %v1580, %v1647
      %v1649 = vand.u32 %v1648, 4294901760
      %v1650 = vsub.f32 %v1648, %v1649
      %v1651 = vand.u32 %v1650, 4294901760
      %1652 = vmatmul.f32.gmra.mxu0 %v1651
      %v1653 = vpop.f32.mrf.mxu0
      %v1654 = vadd.f32 0.0, %v1653
      %v1655 = vand.u32 %v1583, 4294901760
      %v1656 = vsub.f32 %v1583, %v1655
      %v1657 = vand.u32 %v1656, 4294901760
      %v1658 = vsub.f32 %v1656, %v1657
      %v1659 = vand.u32 %v1658, 4294901760
      %1660 = vmatmul.f32.gmra.mxu0 %v1659
      %v1661 = vpop.f32.mrf.mxu0
      %v1662 = vadd.f32 0.0, %v1661
      %v1663 = vand.u32 %v1586, 4294901760
      %v1664 = vsub.f32 %v1586, %v1663
      %v1665 = vand.u32 %v1664, 4294901760
      %v1666 = vsub.f32 %v1664, %v1665
      %v1667 = vand.u32 %v1666, 4294901760
      %1668 = vmatmul.f32.gmra.mxu0 %v1667
      %v1669 = vpop.f32.mrf.mxu0
      %v1670 = vadd.f32 0.0, %v1669
      %v1671 = vand.u32 %v1589, 4294901760
      %v1672 = vsub.f32 %v1589, %v1671
      %v1673 = vand.u32 %v1672, 4294901760
      %v1674 = vsub.f32 %v1672, %v1673
      %v1675 = vand.u32 %v1674, 4294901760
      %1676 = vmatmul.f32.gmra.mxu0 %v1675
      %v1677 = vpop.f32.mrf.mxu0
      %v1678 = vadd.f32 0.0, %v1677
      %v1679 = vand.u32 %v1592, 4294901760
      %v1680 = vsub.f32 %v1592, %v1679
      %v1681 = vand.u32 %v1680, 4294901760
      %v1682 = vsub.f32 %v1680, %v1681
      %v1683 = vand.u32 %v1682, 4294901760
      %1684 = vmatmul.f32.gmra.mxu0 %v1683
      %v1685 = vpop.f32.mrf.mxu0
      %v1686 = vadd.f32 0.0, %v1685
      %v1687 = vand.u32 %v1595, 4294901760
      %v1688 = vsub.f32 %v1595, %v1687
      %v1689 = vand.u32 %v1688, 4294901760
      %v1690 = vsub.f32 %v1688, %v1689
      %v1691 = vand.u32 %v1690, 4294901760
      %1692 = vmatmul.f32.gmra.mxu0 %v1691
      %v1693 = vpop.f32.mrf.mxu0
      %v1694 = vadd.f32 0.0, %v1693
      %v1695 = vand.u32 %v1598, 4294901760
      %v1696 = vsub.f32 %v1598, %v1695
      %v1697 = vand.u32 %v1696, 4294901760
      %v1698 = vsub.f32 %v1696, %v1697
      %v1699 = vand.u32 %v1698, 4294901760
      %1700 = vmatmul.f32.gmra.mxu0 %v1699
      %v1701 = vpop.f32.mrf.mxu0
      %v1702 = vadd.f32 0.0, %v1701
      %v1703 = vand.u32 %v1601, 4294901760
      %v1704 = vsub.f32 %v1601, %v1703
      %v1705 = vand.u32 %v1704, 4294901760
      %v1706 = vsub.f32 %v1704, %v1705
      %v1707 = vand.u32 %v1706, 4294901760
      %1708 = vmatmul.f32.gmra.mxu0 %v1707
      %v1709 = vpop.f32.mrf.mxu0
      %v1710 = vadd.f32 0.0, %v1709
      %v1711 = vand.u32 %v1604, 4294901760
      %v1712 = vsub.f32 %v1604, %v1711
      %v1713 = vand.u32 %v1712, 4294901760
      %v1714 = vsub.f32 %v1712, %v1713
      %v1715 = vand.u32 %v1714, 4294901760
      %1716 = vmatmul.f32.gmra.mxu0 %v1715
      %v1717 = vpop.f32.mrf.mxu0
      %v1718 = vadd.f32 0.0, %v1717
      %v1719 = vand.u32 %v1607, 4294901760
      %v1720 = vsub.f32 %v1607, %v1719
      %v1721 = vand.u32 %v1720, 4294901760
      %v1722 = vsub.f32 %v1720, %v1721
      %v1723 = vand.u32 %v1722, 4294901760
      %1724 = vmatmul.f32.gmra.mxu0 %v1723
      %v1725 = vpop.f32.mrf.mxu0
      %v1726 = vadd.f32 0.0, %v1725
      %v1727 = vand.u32 %v1610, 4294901760
      %v1728 = vsub.f32 %v1610, %v1727
      %v1729 = vand.u32 %v1728, 4294901760
      %v1730 = vsub.f32 %v1728, %v1729
      %v1731 = vand.u32 %v1730, 4294901760
      %1732 = vmatmul.f32.gmra.mxu0 %v1731
      %v1733 = vpop.f32.mrf.mxu0
      %v1734 = vadd.f32 0.0, %v1733
      %v1735 = vand.u32 %v1613, 4294901760
      %v1736 = vsub.f32 %v1613, %v1735
      %v1737 = vand.u32 %v1736, 4294901760
      %v1738 = vsub.f32 %v1736, %v1737
      %v1739 = vand.u32 %v1738, 4294901760
      %1740 = vmatmul.f32.gmra.mxu0 %v1739
      %v1741 = vpop.f32.mrf.mxu0
      %v1742 = vadd.f32 0.0, %v1741
      %v1743 = vand.u32 %v1616, 4294901760
      %v1744 = vsub.f32 %v1616, %v1743
      %v1745 = vand.u32 %v1744, 4294901760
      %v1746 = vsub.f32 %v1744, %v1745
      %v1747 = vand.u32 %v1746, 4294901760
      %1748 = vmatmul.f32.gmra.mxu0 %v1747
      %v1749 = vpop.f32.mrf.mxu0
      %v1750 = vadd.f32 0.0, %v1749
      %v1751 = vand.u32 %v1619, 4294901760
      %v1752 = vsub.f32 %v1619, %v1751
      %v1753 = vand.u32 %v1752, 4294901760
      %v1754 = vsub.f32 %v1752, %v1753
      %v1755 = vand.u32 %v1754, 4294901760
      %1756 = vmatmul.f32.gmra.mxu0 %v1755
      %v1757 = vpop.f32.mrf.mxu0
      %v1758 = vadd.f32 0.0, %v1757
      %v1759 = vand.u32 %v1622, 4294901760
      %v1760 = vsub.f32 %v1622, %v1759
      %v1761 = vand.u32 %v1760, 4294901760
      %v1762 = vsub.f32 %v1760, %v1761
      %v1763 = vand.u32 %v1762, 4294901760
      %1764 = vmatmul.f32.gmra.mxu0 %v1763
      %v1765 = vpop.f32.mrf.mxu0
      %v1766 = vadd.f32 0.0, %v1765
      %v1767 = vand.u32 %v1625, 4294901760
      %v1768 = vsub.f32 %v1625, %v1767
      %v1769 = vand.u32 %v1768, 4294901760
      %v1770 = vsub.f32 %v1768, %v1769
      %v1771 = vand.u32 %v1770, 4294901760
      %1772 = vmatmul.f32.gmra.mxu0 %v1771
      %v1773 = vpop.f32.mrf.mxu0
      %v1774 = vadd.f32 0.0, %v1773
      %1775 = vdwg.mxu0
      %1776 = vmatpush.msra.mxu0 0.0
      %1777 = vmatpush.msra.mxu0 0.0
      %1778 = vmatpush.msra.mxu0 0.0
      %1779 = vmatpush.msra.mxu0 0.0
      %1780 = vmatpush.msra.mxu0 0.0
      %1781 = vmatpush.msra.mxu0 0.0
      %1782 = vmatpush.msra.mxu0 0.0
      %1783 = vmatpush.msra.mxu0 0.0
      %1784 = vmatpush.msra.mxu0 0.0
      %1785 = vmatpush.msra.mxu0 0.0
      %1786 = vmatpush.msra.mxu0 0.0
      %1787 = vmatpush.msra.mxu0 0.0
      %1788 = vmatpush.msra.mxu0 0.0
      %1789 = vmatpush.msra.mxu0 0.0
      %1790 = vmatpush.msra.mxu0 0.0
      %v1791 = vand.u32 %v1628, 4294901760
      %v1792 = vsub.f32 %v1628, %v1791
      %v1793 = vand.u32 %v1792, 4294901760
      %v1794 = vsub.f32 %v1792, %v1793
      %v1795 = vand.u32 %v1794, 4294901760
      %1796 = vmatpush.msra.mxu0 %v1795
      %v1797 = vand.u32 %v1580, 4294901760
      %1798 = vmatmul.f32.gmra.mxu0 %v1797
      %v1799 = vpop.f32.mrf.mxu0
      %v1800 = vadd.f32 %v1654, %v1799
      %v1801 = vand.u32 %v1583, 4294901760
      %1802 = vmatmul.f32.gmra.mxu0 %v1801
      %v1803 = vpop.f32.mrf.mxu0
      %v1804 = vadd.f32 %v1662, %v1803
      %v1805 = vand.u32 %v1586, 4294901760
      %1806 = vmatmul.f32.gmra.mxu0 %v1805
      %v1807 = vpop.f32.mrf.mxu0
      %v1808 = vadd.f32 %v1670, %v1807
      %v1809 = vand.u32 %v1589, 4294901760
      %1810 = vmatmul.f32.gmra.mxu0 %v1809
      %v1811 = vpop.f32.mrf.mxu0
      %v1812 = vadd.f32 %v1678, %v1811
      %v1813 = vand.u32 %v1592, 4294901760
      %1814 = vmatmul.f32.gmra.mxu0 %v1813
      %v1815 = vpop.f32.mrf.mxu0
      %v1816 = vadd.f32 %v1686, %v1815
      %v1817 = vand.u32 %v1595, 4294901760
      %1818 = vmatmul.f32.gmra.mxu0 %v1817
      %v1819 = vpop.f32.mrf.mxu0
      %v1820 = vadd.f32 %v1694, %v1819
      %v1821 = vand.u32 %v1598, 4294901760
      %1822 = vmatmul.f32.gmra.mxu0 %v1821
      %v1823 = vpop.f32.mrf.mxu0
      %v1824 = vadd.f32 %v1702, %v1823
      %v1825 = vand.u32 %v1601, 4294901760
      %1826 = vmatmul.f32.gmra.mxu0 %v1825
      %v1827 = vpop.f32.mrf.mxu0
      %v1828 = vadd.f32 %v1710, %v1827
      %v1829 = vand.u32 %v1604, 4294901760
      %1830 = vmatmul.f32.gmra.mxu0 %v1829
      %v1831 = vpop.f32.mrf.mxu0
      %v1832 = vadd.f32 %v1718, %v1831
      %v1833 = vand.u32 %v1607, 4294901760
      %1834 = vmatmul.f32.gmra.mxu0 %v1833
      %v1835 = vpop.f32.mrf.mxu0
      %v1836 = vadd.f32 %v1726, %v1835
      %v1837 = vand.u32 %v1610, 4294901760
      %1838 = vmatmul.f32.gmra.mxu0 %v1837
      %v1839 = vpop.f32.mrf.mxu0
      %v1840 = vadd.f32 %v1734, %v1839
      %v1841 = vand.u32 %v1613, 4294901760
      %1842 = vmatmul.f32.gmra.mxu0 %v1841
      %v1843 = vpop.f32.mrf.mxu0
      %v1844 = vadd.f32 %v1742, %v1843
      %v1845 = vand.u32 %v1616, 4294901760
      %1846 = vmatmul.f32.gmra.mxu0 %v1845
      %v1847 = vpop.f32.mrf.mxu0
      %v1848 = vadd.f32 %v1750, %v1847
      %v1849 = vand.u32 %v1619, 4294901760
      %1850 = vmatmul.f32.gmra.mxu0 %v1849
      %v1851 = vpop.f32.mrf.mxu0
      %v1852 = vadd.f32 %v1758, %v1851
      %v1853 = vand.u32 %v1622, 4294901760
      %1854 = vmatmul.f32.gmra.mxu0 %v1853
      %v1855 = vpop.f32.mrf.mxu0
      %v1856 = vadd.f32 %v1766, %v1855
      %v1857 = vand.u32 %v1625, 4294901760
      %1858 = vmatmul.f32.gmra.mxu0 %v1857
      %v1859 = vpop.f32.mrf.mxu0
      %v1860 = vadd.f32 %v1774, %v1859
      %1861 = vdwg.mxu0
      %1862 = vmatpush.msra.mxu0 0.0
      %1863 = vmatpush.msra.mxu0 0.0
      %1864 = vmatpush.msra.mxu0 0.0
      %1865 = vmatpush.msra.mxu0 0.0
      %1866 = vmatpush.msra.mxu0 0.0
      %1867 = vmatpush.msra.mxu0 0.0
      %1868 = vmatpush.msra.mxu0 0.0
      %1869 = vmatpush.msra.mxu0 0.0
      %1870 = vmatpush.msra.mxu0 0.0
      %1871 = vmatpush.msra.mxu0 0.0
      %1872 = vmatpush.msra.mxu0 0.0
      %1873 = vmatpush.msra.mxu0 0.0
      %1874 = vmatpush.msra.mxu0 0.0
      %1875 = vmatpush.msra.mxu0 0.0
      %1876 = vmatpush.msra.mxu0 0.0
      %v1877 = vand.u32 %v1628, 4294901760
      %v1878 = vsub.f32 %v1628, %v1877
      %1879 = vmatpush.msra.mxu0 %v1878
      %v1880 = vand.u32 %v1580, 4294901760
      %v1881 = vsub.f32 %v1580, %v1880
      %1882 = vmatmul.f32.gmra.mxu0 %v1881
      %v1883 = vpop.f32.mrf.mxu0
      %v1884 = vadd.f32 %v1800, %v1883
      %v1885 = vand.u32 %v1583, 4294901760
      %v1886 = vsub.f32 %v1583, %v1885
      %1887 = vmatmul.f32.gmra.mxu0 %v1886
      %v1888 = vpop.f32.mrf.mxu0
      %v1889 = vadd.f32 %v1804, %v1888
      %v1890 = vand.u32 %v1586, 4294901760
      %v1891 = vsub.f32 %v1586, %v1890
      %1892 = vmatmul.f32.gmra.mxu0 %v1891
      %v1893 = vpop.f32.mrf.mxu0
      %v1894 = vadd.f32 %v1808, %v1893
      %v1895 = vand.u32 %v1589, 4294901760
      %v1896 = vsub.f32 %v1589, %v1895
      %1897 = vmatmul.f32.gmra.mxu0 %v1896
      %v1898 = vpop.f32.mrf.mxu0
      %v1899 = vadd.f32 %v1812, %v1898
      %v1900 = vand.u32 %v1592, 4294901760
      %v1901 = vsub.f32 %v1592, %v1900
      %1902 = vmatmul.f32.gmra.mxu0 %v1901
      %v1903 = vpop.f32.mrf.mxu0
      %v1904 = vadd.f32 %v1816, %v1903
      %v1905 = vand.u32 %v1595, 4294901760
      %v1906 = vsub.f32 %v1595, %v1905
      %1907 = vmatmul.f32.gmra.mxu0 %v1906
      %v1908 = vpop.f32.mrf.mxu0
      %v1909 = vadd.f32 %v1820, %v1908
      %v1910 = vand.u32 %v1598, 4294901760
      %v1911 = vsub.f32 %v1598, %v1910
      %1912 = vmatmul.f32.gmra.mxu0 %v1911
      %v1913 = vpop.f32.mrf.mxu0
      %v1914 = vadd.f32 %v1824, %v1913
      %v1915 = vand.u32 %v1601, 4294901760
      %v1916 = vsub.f32 %v1601, %v1915
      %1917 = vmatmul.f32.gmra.mxu0 %v1916
      %v1918 = vpop.f32.mrf.mxu0
      %v1919 = vadd.f32 %v1828, %v1918
      %v1920 = vand.u32 %v1604, 4294901760
      %v1921 = vsub.f32 %v1604, %v1920
      %1922 = vmatmul.f32.gmra.mxu0 %v1921
      %v1923 = vpop.f32.mrf.mxu0
      %v1924 = vadd.f32 %v1832, %v1923
      %v1925 = vand.u32 %v1607, 4294901760
      %v1926 = vsub.f32 %v1607, %v1925
      %1927 = vmatmul.f32.gmra.mxu0 %v1926
      %v1928 = vpop.f32.mrf.mxu0
      %v1929 = vadd.f32 %v1836, %v1928
      %v1930 = vand.u32 %v1610, 4294901760
      %v1931 = vsub.f32 %v1610, %v1930
      %1932 = vmatmul.f32.gmra.mxu0 %v1931
      %v1933 = vpop.f32.mrf.mxu0
      %v1934 = vadd.f32 %v1840, %v1933
      %v1935 = vand.u32 %v1613, 4294901760
      %v1936 = vsub.f32 %v1613, %v1935
      %1937 = vmatmul.f32.gmra.mxu0 %v1936
      %v1938 = vpop.f32.mrf.mxu0
      %v1939 = vadd.f32 %v1844, %v1938
      %v1940 = vand.u32 %v1616, 4294901760
      %v1941 = vsub.f32 %v1616, %v1940
      %1942 = vmatmul.f32.gmra.mxu0 %v1941
      %v1943 = vpop.f32.mrf.mxu0
      %v1944 = vadd.f32 %v1848, %v1943
      %v1945 = vand.u32 %v1619, 4294901760
      %v1946 = vsub.f32 %v1619, %v1945
      %1947 = vmatmul.f32.gmra.mxu0 %v1946
      %v1948 = vpop.f32.mrf.mxu0
      %v1949 = vadd.f32 %v1852, %v1948
      %v1950 = vand.u32 %v1622, 4294901760
      %v1951 = vsub.f32 %v1622, %v1950
      %1952 = vmatmul.f32.gmra.mxu0 %v1951
      %v1953 = vpop.f32.mrf.mxu0
      %v1954 = vadd.f32 %v1856, %v1953
      %v1955 = vand.u32 %v1625, 4294901760
      %v1956 = vsub.f32 %v1625, %v1955
      %1957 = vmatmul.f32.gmra.mxu0 %v1956
      %v1958 = vpop.f32.mrf.mxu0
      %v1959 = vadd.f32 %v1860, %v1958
      %1960 = vdwg.mxu0
      %1961 = vmatpush.msra.mxu0 0.0
      %1962 = vmatpush.msra.mxu0 0.0
      %1963 = vmatpush.msra.mxu0 0.0
      %1964 = vmatpush.msra.mxu0 0.0
      %1965 = vmatpush.msra.mxu0 0.0
      %1966 = vmatpush.msra.mxu0 0.0
      %1967 = vmatpush.msra.mxu0 0.0
      %1968 = vmatpush.msra.mxu0 0.0
      %1969 = vmatpush.msra.mxu0 0.0
      %1970 = vmatpush.msra.mxu0 0.0
      %1971 = vmatpush.msra.mxu0 0.0
      %1972 = vmatpush.msra.mxu0 0.0
      %1973 = vmatpush.msra.mxu0 0.0
      %1974 = vmatpush.msra.mxu0 0.0
      %1975 = vmatpush.msra.mxu0 0.0
      %v1976 = vand.u32 %v1628, 4294901760
      %1977 = vmatpush.msra.mxu0 %v1976
      %v1978 = vand.u32 %v1580, 4294901760
      %v1979 = vsub.f32 %v1580, %v1978
      %v1980 = vand.u32 %v1979, 4294901760
      %1981 = vmatmul.f32.gmra.mxu0 %v1980
      %v1982 = vpop.f32.mrf.mxu0
      %v1983 = vadd.f32 %v1884, %v1982
      %v1984 = vand.u32 %v1583, 4294901760
      %v1985 = vsub.f32 %v1583, %v1984
      %v1986 = vand.u32 %v1985, 4294901760
      %1987 = vmatmul.f32.gmra.mxu0 %v1986
      %v1988 = vpop.f32.mrf.mxu0
      %v1989 = vadd.f32 %v1889, %v1988
      %v1990 = vand.u32 %v1586, 4294901760
      %v1991 = vsub.f32 %v1586, %v1990
      %v1992 = vand.u32 %v1991, 4294901760
      %1993 = vmatmul.f32.gmra.mxu0 %v1992
      %v1994 = vpop.f32.mrf.mxu0
      %v1995 = vadd.f32 %v1894, %v1994
      %v1996 = vand.u32 %v1589, 4294901760
      %v1997 = vsub.f32 %v1589, %v1996
      %v1998 = vand.u32 %v1997, 4294901760
      %1999 = vmatmul.f32.gmra.mxu0 %v1998
      %v2000 = vpop.f32.mrf.mxu0
      %v2001 = vadd.f32 %v1899, %v2000
      %v2002 = vand.u32 %v1592, 4294901760
      %v2003 = vsub.f32 %v1592, %v2002
      %v2004 = vand.u32 %v2003, 4294901760
      %2005 = vmatmul.f32.gmra.mxu0 %v2004
      %v2006 = vpop.f32.mrf.mxu0
      %v2007 = vadd.f32 %v1904, %v2006
      %v2008 = vand.u32 %v1595, 4294901760
      %v2009 = vsub.f32 %v1595, %v2008
      %v2010 = vand.u32 %v2009, 4294901760
      %2011 = vmatmul.f32.gmra.mxu0 %v2010
      %v2012 = vpop.f32.mrf.mxu0
      %v2013 = vadd.f32 %v1909, %v2012
      %v2014 = vand.u32 %v1598, 4294901760
      %v2015 = vsub.f32 %v1598, %v2014
      %v2016 = vand.u32 %v2015, 4294901760
      %2017 = vmatmul.f32.gmra.mxu0 %v2016
      %v2018 = vpop.f32.mrf.mxu0
      %v2019 = vadd.f32 %v1914, %v2018
      %v2020 = vand.u32 %v1601, 4294901760
      %v2021 = vsub.f32 %v1601, %v2020
      %v2022 = vand.u32 %v2021, 4294901760
      %2023 = vmatmul.f32.gmra.mxu0 %v2022
      %v2024 = vpop.f32.mrf.mxu0
      %v2025 = vadd.f32 %v1919, %v2024
      %v2026 = vand.u32 %v1604, 4294901760
      %v2027 = vsub.f32 %v1604, %v2026
      %v2028 = vand.u32 %v2027, 4294901760
      %2029 = vmatmul.f32.gmra.mxu0 %v2028
      %v2030 = vpop.f32.mrf.mxu0
      %v2031 = vadd.f32 %v1924, %v2030
      %v2032 = vand.u32 %v1607, 4294901760
      %v2033 = vsub.f32 %v1607, %v2032
      %v2034 = vand.u32 %v2033, 4294901760
      %2035 = vmatmul.f32.gmra.mxu0 %v2034
      %v2036 = vpop.f32.mrf.mxu0
      %v2037 = vadd.f32 %v1929, %v2036
      %v2038 = vand.u32 %v1610, 4294901760
      %v2039 = vsub.f32 %v1610, %v2038
      %v2040 = vand.u32 %v2039, 4294901760
      %2041 = vmatmul.f32.gmra.mxu0 %v2040
      %v2042 = vpop.f32.mrf.mxu0
      %v2043 = vadd.f32 %v1934, %v2042
      %v2044 = vand.u32 %v1613, 4294901760
      %v2045 = vsub.f32 %v1613, %v2044
      %v2046 = vand.u32 %v2045, 4294901760
      %2047 = vmatmul.f32.gmra.mxu0 %v2046
      %v2048 = vpop.f32.mrf.mxu0
      %v2049 = vadd.f32 %v1939, %v2048
      %v2050 = vand.u32 %v1616, 4294901760
      %v2051 = vsub.f32 %v1616, %v2050
      %v2052 = vand.u32 %v2051, 4294901760
      %2053 = vmatmul.f32.gmra.mxu0 %v2052
      %v2054 = vpop.f32.mrf.mxu0
      %v2055 = vadd.f32 %v1944, %v2054
      %v2056 = vand.u32 %v1619, 4294901760
      %v2057 = vsub.f32 %v1619, %v2056
      %v2058 = vand.u32 %v2057, 4294901760
      %2059 = vmatmul.f32.gmra.mxu0 %v2058
      %v2060 = vpop.f32.mrf.mxu0
      %v2061 = vadd.f32 %v1949, %v2060
      %v2062 = vand.u32 %v1622, 4294901760
      %v2063 = vsub.f32 %v1622, %v2062
      %v2064 = vand.u32 %v2063, 4294901760
      %2065 = vmatmul.f32.gmra.mxu0 %v2064
      %v2066 = vpop.f32.mrf.mxu0
      %v2067 = vadd.f32 %v1954, %v2066
      %v2068 = vand.u32 %v1625, 4294901760
      %v2069 = vsub.f32 %v1625, %v2068
      %v2070 = vand.u32 %v2069, 4294901760
      %2071 = vmatmul.f32.gmra.mxu0 %v2070
      %v2072 = vpop.f32.mrf.mxu0
      %v2073 = vadd.f32 %v1959, %v2072
      %2074 = vdwg.mxu0
      %2075 = vmatpush.msra.mxu0 0.0
      %2076 = vmatpush.msra.mxu0 0.0
      %2077 = vmatpush.msra.mxu0 0.0
      %2078 = vmatpush.msra.mxu0 0.0
      %2079 = vmatpush.msra.mxu0 0.0
      %2080 = vmatpush.msra.mxu0 0.0
      %2081 = vmatpush.msra.mxu0 0.0
      %2082 = vmatpush.msra.mxu0 0.0
      %2083 = vmatpush.msra.mxu0 0.0
      %2084 = vmatpush.msra.mxu0 0.0
      %2085 = vmatpush.msra.mxu0 0.0
      %2086 = vmatpush.msra.mxu0 0.0
      %2087 = vmatpush.msra.mxu0 0.0
      %2088 = vmatpush.msra.mxu0 0.0
      %2089 = vmatpush.msra.mxu0 0.0
      %v2090 = vand.u32 %v1628, 4294901760
      %v2091 = vsub.f32 %v1628, %v2090
      %v2092 = vand.u32 %v2091, 4294901760
      %2093 = vmatpush.msra.mxu0 %v2092
      %v2094 = vand.u32 %v1580, 4294901760
      %2095 = vmatmul.f32.gmra.mxu0 %v2094
      %v2096 = vpop.f32.mrf.mxu0
      %v2097 = vadd.f32 %v1983, %v2096
      %v2098 = vand.u32 %v1583, 4294901760
      %2099 = vmatmul.f32.gmra.mxu0 %v2098
      %v2100 = vpop.f32.mrf.mxu0
      %v2101 = vadd.f32 %v1989, %v2100
      %v2102 = vand.u32 %v1586, 4294901760
      %2103 = vmatmul.f32.gmra.mxu0 %v2102
      %v2104 = vpop.f32.mrf.mxu0
      %v2105 = vadd.f32 %v1995, %v2104
      %v2106 = vand.u32 %v1589, 4294901760
      %2107 = vmatmul.f32.gmra.mxu0 %v2106
      %v2108 = vpop.f32.mrf.mxu0
      %v2109 = vadd.f32 %v2001, %v2108
      %v2110 = vand.u32 %v1592, 4294901760
      %2111 = vmatmul.f32.gmra.mxu0 %v2110
      %v2112 = vpop.f32.mrf.mxu0
      %v2113 = vadd.f32 %v2007, %v2112
      %v2114 = vand.u32 %v1595, 4294901760
      %2115 = vmatmul.f32.gmra.mxu0 %v2114
      %v2116 = vpop.f32.mrf.mxu0
      %v2117 = vadd.f32 %v2013, %v2116
      %v2118 = vand.u32 %v1598, 4294901760
      %2119 = vmatmul.f32.gmra.mxu0 %v2118
      %v2120 = vpop.f32.mrf.mxu0
      %v2121 = vadd.f32 %v2019, %v2120
      %v2122 = vand.u32 %v1601, 4294901760
      %2123 = vmatmul.f32.gmra.mxu0 %v2122
      %v2124 = vpop.f32.mrf.mxu0
      %v2125 = vadd.f32 %v2025, %v2124
      %v2126 = vand.u32 %v1604, 4294901760
      %2127 = vmatmul.f32.gmra.mxu0 %v2126
      %v2128 = vpop.f32.mrf.mxu0
      %v2129 = vadd.f32 %v2031, %v2128
      %v2130 = vand.u32 %v1607, 4294901760
      %2131 = vmatmul.f32.gmra.mxu0 %v2130
      %v2132 = vpop.f32.mrf.mxu0
      %v2133 = vadd.f32 %v2037, %v2132
      %v2134 = vand.u32 %v1610, 4294901760
      %2135 = vmatmul.f32.gmra.mxu0 %v2134
      %v2136 = vpop.f32.mrf.mxu0
      %v2137 = vadd.f32 %v2043, %v2136
      %v2138 = vand.u32 %v1613, 4294901760
      %2139 = vmatmul.f32.gmra.mxu0 %v2138
      %v2140 = vpop.f32.mrf.mxu0
      %v2141 = vadd.f32 %v2049, %v2140
      %v2142 = vand.u32 %v1616, 4294901760
      %2143 = vmatmul.f32.gmra.mxu0 %v2142
      %v2144 = vpop.f32.mrf.mxu0
      %v2145 = vadd.f32 %v2055, %v2144
      %v2146 = vand.u32 %v1619, 4294901760
      %2147 = vmatmul.f32.gmra.mxu0 %v2146
      %v2148 = vpop.f32.mrf.mxu0
      %v2149 = vadd.f32 %v2061, %v2148
      %v2150 = vand.u32 %v1622, 4294901760
      %2151 = vmatmul.f32.gmra.mxu0 %v2150
      %v2152 = vpop.f32.mrf.mxu0
      %v2153 = vadd.f32 %v2067, %v2152
      %v2154 = vand.u32 %v1625, 4294901760
      %2155 = vmatmul.f32.gmra.mxu0 %v2154
      %v2156 = vpop.f32.mrf.mxu0
      %v2157 = vadd.f32 %v2073, %v2156
      %2158 = vdwg.mxu0
      %2159 = vmatpush.msra.mxu0 0.0
      %2160 = vmatpush.msra.mxu0 0.0
      %2161 = vmatpush.msra.mxu0 0.0
      %2162 = vmatpush.msra.mxu0 0.0
      %2163 = vmatpush.msra.mxu0 0.0
      %2164 = vmatpush.msra.mxu0 0.0
      %2165 = vmatpush.msra.mxu0 0.0
      %2166 = vmatpush.msra.mxu0 0.0
      %2167 = vmatpush.msra.mxu0 0.0
      %2168 = vmatpush.msra.mxu0 0.0
      %2169 = vmatpush.msra.mxu0 0.0
      %2170 = vmatpush.msra.mxu0 0.0
      %2171 = vmatpush.msra.mxu0 0.0
      %2172 = vmatpush.msra.mxu0 0.0
      %2173 = vmatpush.msra.mxu0 0.0
      %v2174 = vand.u32 %v1628, 4294901760
      %2175 = vmatpush.msra.mxu0 %v2174
      %v2176 = vand.u32 %v1580, 4294901760
      %2177 = vmatmul.f32.gmra.mxu0 %v2176
      %v2178 = vpop.f32.mrf.mxu0
      %v2179 = vadd.f32 %v2097, %v2178
      %v2180 = vand.u32 %v1583, 4294901760
      %2181 = vmatmul.f32.gmra.mxu0 %v2180
      %v2182 = vpop.f32.mrf.mxu0
      %v2183 = vadd.f32 %v2101, %v2182
      %v2184 = vand.u32 %v1586, 4294901760
      %2185 = vmatmul.f32.gmra.mxu0 %v2184
      %v2186 = vpop.f32.mrf.mxu0
      %v2187 = vadd.f32 %v2105, %v2186
      %v2188 = vand.u32 %v1589, 4294901760
      %2189 = vmatmul.f32.gmra.mxu0 %v2188
      %v2190 = vpop.f32.mrf.mxu0
      %v2191 = vadd.f32 %v2109, %v2190
      %v2192 = vand.u32 %v1592, 4294901760
      %2193 = vmatmul.f32.gmra.mxu0 %v2192
      %v2194 = vpop.f32.mrf.mxu0
      %v2195 = vadd.f32 %v2113, %v2194
      %v2196 = vand.u32 %v1595, 4294901760
      %2197 = vmatmul.f32.gmra.mxu0 %v2196
      %v2198 = vpop.f32.mrf.mxu0
      %v2199 = vadd.f32 %v2117, %v2198
      %v2200 = vand.u32 %v1598, 4294901760
      %2201 = vmatmul.f32.gmra.mxu0 %v2200
      %v2202 = vpop.f32.mrf.mxu0
      %v2203 = vadd.f32 %v2121, %v2202
      %v2204 = vand.u32 %v1601, 4294901760
      %2205 = vmatmul.f32.gmra.mxu0 %v2204
      %v2206 = vpop.f32.mrf.mxu0
      %v2207 = vadd.f32 %v2125, %v2206
      %v2208 = vand.u32 %v1604, 4294901760
      %2209 = vmatmul.f32.gmra.mxu0 %v2208
      %v2210 = vpop.f32.mrf.mxu0
      %v2211 = vadd.f32 %v2129, %v2210
      %v2212 = vand.u32 %v1607, 4294901760
      %2213 = vmatmul.f32.gmra.mxu0 %v2212
      %v2214 = vpop.f32.mrf.mxu0
      %v2215 = vadd.f32 %v2133, %v2214
      %v2216 = vand.u32 %v1610, 4294901760
      %2217 = vmatmul.f32.gmra.mxu0 %v2216
      %v2218 = vpop.f32.mrf.mxu0
      %v2219 = vadd.f32 %v2137, %v2218
      %v2220 = vand.u32 %v1613, 4294901760
      %2221 = vmatmul.f32.gmra.mxu0 %v2220
      %v2222 = vpop.f32.mrf.mxu0
      %v2223 = vadd.f32 %v2141, %v2222
      %v2224 = vand.u32 %v1616, 4294901760
      %2225 = vmatmul.f32.gmra.mxu0 %v2224
      %v2226 = vpop.f32.mrf.mxu0
      %v2227 = vadd.f32 %v2145, %v2226
      %v2228 = vand.u32 %v1619, 4294901760
      %2229 = vmatmul.f32.gmra.mxu0 %v2228
      %v2230 = vpop.f32.mrf.mxu0
      %v2231 = vadd.f32 %v2149, %v2230
      %v2232 = vand.u32 %v1622, 4294901760
      %2233 = vmatmul.f32.gmra.mxu0 %v2232
      %v2234 = vpop.f32.mrf.mxu0
      %v2235 = vadd.f32 %v2153, %v2234
      %v2236 = vand.u32 %v1625, 4294901760
      %2237 = vmatmul.f32.gmra.mxu0 %v2236
      %v2238 = vpop.f32.mrf.mxu0
      %v2239 = vadd.f32 %v2157, %v2238
      %2240 = vdwg.mxu0
      %v2241 = vadd.f32 %v1497, %v2179
      %v2242 = vadd.f32 %v1501, %v2183
      %v2243 = vadd.f32 %v1505, %v2187
      %v2244 = vadd.f32 %v1509, %v2191
      %v2245 = vadd.f32 %v1513, %v2195
      %v2246 = vadd.f32 %v1517, %v2199
      %v2247 = vadd.f32 %v1521, %v2203
      %v2248 = vadd.f32 %v1525, %v2207
      %v2249 = vadd.f32 %v1529, %v2211
      %v2250 = vadd.f32 %v1533, %v2215
      %v2251 = vadd.f32 %v1537, %v2219
      %v2252 = vadd.f32 %v1541, %v2223
      %v2253 = vadd.f32 %v1545, %v2227
      %v2254 = vadd.f32 %v1549, %v2231
      %v2255 = vadd.f32 %v1553, %v2235
      %v2256 = vadd.f32 %v1557, %v2239
      %v2257 = vld [vmem:[%s2] sm:$0x1]
      %v2259 = vperm.slane %v2257, 0
      %v2261 = vadd.f32 %v2241, %v2259
      %v2262 = vadd.f32 %v2242, %v2259
      %v2263 = vadd.f32 %v2243, %v2259
      %v2264 = vadd.f32 %v2244, %v2259
      %v2265 = vadd.f32 %v2245, %v2259
      %v2266 = vadd.f32 %v2246, %v2259
      %v2267 = vadd.f32 %v2247, %v2259
      %v2268 = vadd.f32 %v2248, %v2259
      %v2269 = vadd.f32 %v2249, %v2259
      %v2270 = vadd.f32 %v2250, %v2259
      %v2271 = vadd.f32 %v2251, %v2259
      %v2272 = vadd.f32 %v2252, %v2259
      %v2273 = vadd.f32 %v2253, %v2259
      %v2274 = vadd.f32 %v2254, %v2259
      %v2275 = vadd.f32 %v2255, %v2259
      %v2276 = vadd.f32 %v2256, %v2259
      %v2277 = vmax.f32 %v2261, 0.0
      %v2278 = vmax.f32 %v2262, 0.0
      %v2279 = vmax.f32 %v2263, 0.0
      %v2280 = vmax.f32 %v2264, 0.0
      %v2281 = vmax.f32 %v2265, 0.0
      %v2282 = vmax.f32 %v2266, 0.0
      %v2283 = vmax.f32 %v2267, 0.0
      %v2284 = vmax.f32 %v2268, 0.0
      %v2285 = vmax.f32 %v2269, 0.0
      %v2286 = vmax.f32 %v2270, 0.0
      %v2287 = vmax.f32 %v2271, 0.0
      %v2288 = vmax.f32 %v2272, 0.0
      %v2289 = vmax.f32 %v2273, 0.0
      %v2290 = vmax.f32 %v2274, 0.0
      %v2291 = vmax.f32 %v2275, 0.0
      %v2292 = vmax.f32 %v2276, 0.0
      %vm2293 = vcmask 64512
      %2294 = vst.msk [vmem:[%s192] sm:$0xff] %vm2293, %v2277
      %2295 = vst.msk [vmem:[%s192 + $0x8] sm:$0xff] %vm2293, %v2278
      %2296 = vst.msk [vmem:[%s192 + $0x10] sm:$0xff] %vm2293, %v2279
      %2297 = vst.msk [vmem:[%s192 + $0x18] sm:$0xff] %vm2293, %v2280
      %2298 = vst.msk [vmem:[%s192 + $0x20] sm:$0xff] %vm2293, %v2281
      %2299 = vst.msk [vmem:[%s192 + $0x28] sm:$0xff] %vm2293, %v2282
      %2300 = vst.msk [vmem:[%s192 + $0x30] sm:$0xff] %vm2293, %v2283
      %2301 = vst.msk [vmem:[%s192 + $0x38] sm:$0xff] %vm2293, %v2284
      %2302 = vst.msk [vmem:[%s192 + $0x40] sm:$0xff] %vm2293, %v2285
      %2303 = vst.msk [vmem:[%s192 + $0x48] sm:$0xff] %vm2293, %v2286
      %2304 = vst.msk [vmem:[%s192 + $0x50] sm:$0xff] %vm2293, %v2287
      %2305 = vst.msk [vmem:[%s192 + $0x58] sm:$0xff] %vm2293, %v2288
      %2306 = vst.msk [vmem:[%s192 + $0x60] sm:$0xff] %vm2293, %v2289
      %2307 = vst.msk [vmem:[%s192 + $0x68] sm:$0xff] %vm2293, %v2290
      %2308 = vst.msk [vmem:[%s192 + $0x70] sm:$0xff] %vm2293, %v2291
      %2309 = vst.msk [vmem:[%s192 + $0x78] sm:$0xff] %vm2293, %v2292
      %s2310 = smul.u32 16, %s19
      %p2311 = scmp.lt.s32.totalorder %s18, 1
      %s2312 = scalar_select %p2311, %s18, 1
      %p2313 = scmp.lt.s32.totalorder %s2310, 31
      %s2314 = scalar_select %p2313, %s2310, 31
      %s2315 = smul.addr %s2312, 32
      %s2316 = sadd.s32 %s2314, %s2315
      %s2317 = smul.addr %s2316, 8
      %s2318 = scalar_lea.vmem %s3, %s2317
      // Predicated region
      $region33: #{tpu_custom_call.1} parent=31 // pred_check
        %p2319 = pneg %p114
      $region34: #{tpu_custom_call.1} parent=31 // pred_check_branch
        %2321 = sbr.rel (%p2319) target = $region36
      $region35: #{tpu_custom_call.1} parent=31 // pred_region
        %s2322 = smul.u32 16, %s19
      $region36: #{tpu_custom_call.1} parent=31 // pred_fallthru
        _
    $region32: #{tpu_custom_call.1} parent=5 // pred_fallthru
      _
    %p2323 = scmp.le.s32.totalorder 2, %s9
    // Predicated region
    $region37: #{tpu_custom_call.1} parent=5 // pred_check
      %p2324 = pneg %p2323
    $region38: #{tpu_custom_call.1} parent=5 // pred_check_branch
      %2326 = sbr.rel (%p2324) target = $region40
    $region39: #{tpu_custom_call.1} parent=5 // pred_region
      %s2327 = ssub.s32 %s9, 2
      // Predicated region
      $region41: #{tpu_custom_call.1} parent=39 // pred_check
        %p2328 = pneg %p120
      $region42: #{tpu_custom_call.1} parent=39 // pred_check_branch
        %2330 = sbr.rel (%p2328) target = $region44
      $region43: #{tpu_custom_call.1} parent=39 // pred_region
        %s2331 = smul.u32 16, %s21
        %p2332 = scmp.lt.s32.totalorder %s20, 1
        %s2333 = scalar_select %p2332, %s20, 1
        %p2334 = scmp.lt.s32.totalorder %s2331, 31
        %s2335 = scalar_select %p2334, %s2331, 31
        %s2336 = smul.addr %s2333, 32
        %s2337 = sadd.s32 %s2335, %s2336
        %s2338 = smul.addr %s2337, 8
        %s2339 = scalar_lea.vmem %s3, %s2338
      $region44: #{tpu_custom_call.1} parent=39 // pred_fallthru
        _
    $region40: #{tpu_custom_call.1} parent=5 // pred_fallthru
      _
  $region6: #{tpu_custom_call.1} parent=0 // loop_footer
    %s13 = sadd.s32 1, %s9
  $region7: #{tpu_custom_call.1} parent=0 // loop_footer_branch
    %8 = sbr.rel target = $region3
  $region8: #{tpu_custom_call.1} parent=0 // loop_exit
    _

</llo_original>
